<compile_context>
chip_gen: v6e
topology: v6e:2x2x1
jax: 0.10.0
libtpu: 0.0.40
codegen_flags: <defaults>
</compile_context>

<pallas_src>
import numpy as np
import jax
import jax.numpy as jnp
from jax.experimental import pallas as pl
from jax.experimental.pallas import tpu as pltpu

FEAPE = 6                         # positional-encoding freqs applied to `features`
IN_CHANNELS = 4
HIDDEN = 32                       # per-head hidden width
HIDDEN_PAD = 128                  # 3*32 fused heads, padded to full lane width
OUT_W = 8                         # diffuse(3) | tint(3) | roughness(2)
PE_W = 2 * FEAPE * IN_CHANNELS    # 48 (sin + cos)
D_IN = 3 + IN_CHANNELS + PE_W     # 55 (original MLP input width)
X_ROWS = 8                        # kernel input rows: feat(4) | pts(3) | ones(1)
DIFFUSE_MUL = 1.0
DIFFUSE_BIAS = -2.0
TINT_BIAS = -1.0
ROUGHNESS_BIAS = 1.0


def _round_up(x, m):
    return ((x + m - 1) // m) * m


# ------------------------- host-side constant tables -------------------------
def _pe_const():
    """(48, 2) table: column 0 = frequency, column 1 = phase offset (0 / pi/2).

    Kernel PE row k -> channel k%4, frequency 2**((k//4) % 6), sin for k<24 / cos
    (sin(t+pi/2)) for k>=24.  Passed as a kernel input (not a captured constant)."""
    k = np.arange(PE_W)
    freq = (2.0 ** ((k // IN_CHANNELS) % FEAPE)).astype(np.float32)
    off = np.where(k < FEAPE * IN_CHANNELS, 0.0, np.pi / 2).astype(np.float32)
    return np.stack([freq, off], axis=1)


_PE_CONST = _pe_const()


def _pe_orig_cols():
    """orig_mlp_in_column[kernel_pe_row] for the 55-wide original MLP input."""
    base = 3 + IN_CHANNELS
    npe = FEAPE * IN_CHANNELS
    cols = []
    for k in range(PE_W):
        c = k % IN_CHANNELS
        j = (k // IN_CHANNELS) % FEAPE
        cols.append(base + (npe if k >= npe else 0) + c * FEAPE + j)
    return np.asarray(cols)


# ----------------------------- glue (plain JAX) ------------------------------
def positional_encoding(positions, freqs):
    """Exact port of the PyTorch helper (channel-major / interleaved freqs)."""
    freq_bands = 2.0 ** jnp.arange(freqs, dtype=jnp.float32)
    pts = (positions[..., None] * freq_bands).reshape(
        positions.shape[:-1] + (freqs * positions.shape[-1],))
    return jnp.concatenate([jnp.sin(pts), jnp.cos(pts)], axis=-1)


# ------------------------------- Pallas kernel -------------------------------
def _hydra_kernel(x_ref, pe_ref, w1x_ref, w1pe_ref, w2_ref, b2_ref, w3_ref, b3c_ref,
                  out_ref):
    x = x_ref[...]                                    # (8, N) f32: feat4 | pts3 | ones
    feat = x[0:4, :]                                  # (4, N)

    # Positional encoding (feature-major, f32 on VPU/EUP).  One 48-row sin covers
    # both sin and cos: cos t = sin(t + pi/2); freq/offset come from the PE table.
    freq = pe_ref[:, 0:1]                             # (48, 1)
    off = pe_ref[:, 1:2]                              # (48, 1)
    base8 = jnp.concatenate([feat, feat], axis=0)     # (8, N)  one sub-vreg shuffle
    base = jnp.concatenate([base8] * FEAPE, axis=0)   # (48, N) vreg-aligned copies
    sin48 = jnp.sin(base * freq + off)

    # Fused block-diagonal MLP, transposed form: bf16 MXU operands, f32 accumulation
    # and f32 bias/ReLU/epilogue (portable to v5e).  b1 is folded via the ones row.
    h = (jnp.dot(w1x_ref[...], x.astype(jnp.bfloat16),
                 preferred_element_type=jnp.float32) +
         jnp.dot(w1pe_ref[...], sin48.astype(jnp.bfloat16),
                 preferred_element_type=jnp.float32))                  # (128, N)
    h = jnp.maximum(h, 0.0).astype(jnp.bfloat16)
    h = jnp.dot(w2_ref[...], h, preferred_element_type=jnp.float32) + b2_ref[...]
    h = jnp.maximum(h, 0.0).astype(jnp.bfloat16)
    z = jnp.dot(w3_ref[...], h, preferred_element_type=jnp.float32) + b3c_ref[:, 0:1]

    # Sigmoid epilogue (roughness /2 folded host-side):
    #   rows 0..5: 1/(1+exp(-z));  rows 6..7: 1/(2+exp(-z)) with b3 shifted by -ln2.
    z = jnp.maximum(z, -60.0)           # keep exp finite (padded / extreme inputs)
    out_ref[...] = pl.reciprocal(b3c_ref[:, 1:2] + jnp.exp(-z), approx=True)


# ------------------------------ parameter init -------------------------------
def init_params(key, in_dim, hidden):
    """Deterministic uniform(-1/sqrt(fan_in), 1/sqrt(fan_in)) init (nn.Linear style)."""
    def linear(k, fan_in, fan_out):
        kw, kb = jax.random.split(k)
        scale = 1.0 / float(np.sqrt(fan_in))
        w = jax.random.uniform(kw, (fan_in, fan_out), jnp.float32, -scale, scale)
        b = jax.random.uniform(kb, (1, fan_out), jnp.float32, -scale, scale)
        return w, b

    keys = jax.random.split(key, 9)
    params = []
    for head in range(3):                       # diffuse, tint, roughness
        out_dim = 3 if head < 2 else 2
        k1, k2, k3 = keys[head * 3:(head + 1) * 3]
        params += [*linear(k1, in_dim, hidden),
                   *linear(k2, hidden, hidden),
                   *linear(k3, hidden, out_dim)]
    return params


def fuse_params(params):
    """Fuse the three per-head MLPs into one transposed block-diagonal MLP.

    Returns (w1x_T, w1pe_T, w2_T, b2, w3_T, b3c):
      w1x_T  (128, 8)   bf16 : columns [feat4 | pts3 | b1-via-ones-row]
      w1pe_T (128, 48)  bf16 : PE columns permuted to the kernel's freq-major order
      w2_T   (128, 128) bf16 : block-diagonal
      b2     (128, 1)   f32
      w3_T   (8, 128)   bf16 : diffuse_mul folded in
      b3c    (8, 2)     f32  : col0 = output bias (roughness shifted by -ln2),
                               col1 = sigmoid denominator constant (1 or 2)
    """
    heads = [params[0:6], params[6:12], params[12:18]]
    H, HP = HIDDEN, HIDDEN_PAD

    w1x = np.zeros((HP, X_ROWS), np.float32)
    w1pe = np.zeros((HP, PE_W), np.float32)
    w2 = np.zeros((HP, HP), np.float32)
    b2 = np.zeros((HP, 1), np.float32)
    w3 = np.zeros((OUT_W, HP), np.float32)
    b3c = np.zeros((OUT_W, 2), np.float32)

    pe_cols = _pe_orig_cols()
    out_slices = [(0, 3), (3, 6), (6, 8)]
    out_mul = [DIFFUSE_MUL, 1.0, 1.0]
    out_bias = [DIFFUSE_BIAS, TINT_BIAS, ROUGHNESS_BIAS]

    for h, head in enumerate(heads):
        hw1, hb1, hw2, hb2, hw3, hb3 = (np.asarray(p, np.float32) for p in head)
        lo, hi = h * H, (h + 1) * H
        olo, ohi = out_slices[h]
        # layer 1 (original row order: pts 0..2, features 3..6, PE 7..54)
        w1x[lo:hi, 0:4] = hw1[3:7, :].T          # feature rows
        w1x[lo:hi, 4:7] = hw1[0:3, :].T          # pts rows
        w1x[lo:hi, 7] = hb1[0, :]                # bias via ones row
        w1pe[lo:hi, :] = hw1[pe_cols, :].T       # PE rows, kernel ordering
        # layer 2 (block diagonal)
        w2[lo:hi, lo:hi] = hw2.T
        b2[lo:hi, 0] = hb2[0, :]
        # layer 3: fold diffuse_mul and per-head output bias
        w3[olo:ohi, lo:hi] = (out_mul[h] * hw3).T
        b3c[olo:ohi, 0] = out_mul[h] * hb3[0, :] + out_bias[h]
        b3c[olo:ohi, 1] = 1.0
    # roughness rows: sigmoid(z)/2 == 1 / (2 + exp(-(z - ln2)))
    b3c[6:8, 0] -= np.log(2.0)
    b3c[6:8, 1] = 2.0

    return (jnp.asarray(w1x, jnp.bfloat16), jnp.asarray(w1pe, jnp.bfloat16),
            jnp.asarray(w2, jnp.bfloat16), jnp.asarray(b2, jnp.float32),
            jnp.asarray(w3, jnp.bfloat16), jnp.asarray(b3c, jnp.float32))


# ---------------------------------- wrapper -----------------------------------
def hydra_mlp_diffuse_forward(pts, viewdirs, features, fused_params, *, block_b=8192):
    del viewdirs  # view_encoder / roughness_view_encoder are None in this config
    # `size = pts[..., 3:4]` only feeds the pospe>0 IPE branch, which is disabled.
    B = pts.shape[0]
    # Feature-major (lane-dense) input slab: rows = [features | pts.xyz | ones].
    x_t = jnp.concatenate([features.astype(jnp.float32).T,
                           pts[:, :3].astype(jnp.float32).T,
                           jnp.ones((1, B), jnp.float32)], axis=0)       # (8, B)

    block_b = max(128, (min(block_b, _round_up(B, 128)) // 128) * 128)
    n_blocks = pl.cdiv(B, block_b)
    if n_blocks > 1 and n_blocks % 2 == 1:   # v7x: even block count keeps both TCs busy
        n_blocks += 1
        block_b = _round_up(pl.cdiv(B, n_blocks), 128)
    B_pad = n_blocks * block_b
    if B_pad != B:
        x_t = jnp.pad(x_t, ((0, 0), (0, B_pad - B)))   # zero tail; sliced off below

    w1x, w1pe, w2, b2, w3, b3c = fused_params
    pe = jnp.asarray(_PE_CONST)

    def fixed(shape):       # whole-array block, same index each step -> fetched once
        return pl.BlockSpec(shape, lambda i: (0, 0))

    weight_bytes = (w1x.size + w1pe.size + w2.size + w3.size) * 2 \
        + (b2.size + b3c.size + pe.size) * 4
    cost = pl.CostEstimate(
        flops=2 * B_pad * (X_ROWS * HIDDEN_PAD + PE_W * HIDDEN_PAD
                           + HIDDEN_PAD * HIDDEN_PAD + HIDDEN_PAD * OUT_W),
        transcendentals=B_pad * (PE_W + OUT_W),
        bytes_accessed=B_pad * (X_ROWS + OUT_W) * 4 + weight_bytes)

    out = pl.pallas_call(
        _hydra_kernel,
        out_shape=jax.ShapeDtypeStruct((OUT_W, B_pad), jnp.float32),
        grid_spec=pltpu.PrefetchScalarGridSpec(
            num_scalar_prefetch=0,
            grid=(n_blocks,),
            in_specs=[pl.BlockSpec((X_ROWS, block_b), lambda i: (0, i)),
                      fixed((PE_W, 2)),
                      fixed((HIDDEN_PAD, X_ROWS)),
                      fixed((HIDDEN_PAD, PE_W)),
                      fixed((HIDDEN_PAD, HIDDEN_PAD)),
                      fixed((HIDDEN_PAD, 1)),
                      fixed((OUT_W, HIDDEN_PAD)),
                      fixed((OUT_W, 2))],
            out_specs=pl.BlockSpec((OUT_W, block_b), lambda i: (0, i))),
        compiler_params=pltpu.CompilerParams(
            dimension_semantics=("parallel",),
            vmem_limit_bytes=int(min(48 << 20, max(24 << 20, 4096 * block_b)))),
        cost_estimate=cost,
    )(x_t, pe, w1x, w1pe, w2, b2, w3, b3c)

    out = out[:, :B]                     # (8, B) lane-dense slab
    diffuse = out[0:3, :].T
    tint = out[3:6, :].T
    extra = dict(diffuse=diffuse, r1=out[6:7, :].T, r2=out[7:8, :].T, tint=tint)
    return diffuse, tint, extra


# ------------------------------ pure-JAX reference ----------------------------
def reference_forward(pts, viewdirs, features, params):
    del viewdirs
    mlp_in = jnp.concatenate(
        [pts[..., :3], features, positional_encoding(features, FEAPE)], axis=-1)

    def mlp(x, p):
        w1, b1, w2, b2, w3, b3 = p
        h = jnp.maximum(x @ w1 + b1, 0.0)
        h = jnp.maximum(h @ w2 + b2, 0.0)
        return h @ w3 + b3

    d = jax.nn.sigmoid(DIFFUSE_MUL * mlp(mlp_in, params[0:6]) + DIFFUSE_BIAS)
    t = jax.nn.sigmoid(mlp(mlp_in, params[6:12]) + TINT_BIAS)
    r = jax.nn.sigmoid(mlp(mlp_in, params[12:18]) + ROUGHNESS_BIAS) / 2
    return d, t, r


if __name__ == "__main__":
    key = jax.random.PRNGKey(0)
    kp, kv, kf, kw = jax.random.split(key, 4)
    B = 200   # not a multiple of 128 -> exercises the padded-tail path
    pts = jax.random.normal(kp, (B, 4), jnp.float32)        # xyz + size
    viewdirs = jax.random.normal(kv, (B, 3), jnp.float32)
    features = jax.random.normal(kf, (B, IN_CHANNELS), jnp.float32)

    params = init_params(kw, D_IN, HIDDEN)                  # in_mlpC = 55, hidden = 32
    fused = fuse_params(params)

    diffuse, tint, extra = hydra_mlp_diffuse_forward(pts, viewdirs, features, fused)
    jax.block_until_ready((diffuse, tint, extra))

    d_ref, t_ref, r_ref = reference_forward(pts, viewdirs, features, params)
    # bf16 matmul operands + approx reciprocal -> relaxed tolerance vs f32 reference.
    np.testing.assert_allclose(np.asarray(diffuse), np.asarray(d_ref), rtol=0, atol=2e-2)
    np.testing.assert_allclose(np.asarray(tint), np.asarray(t_ref), rtol=0, atol=2e-2)
    np.testing.assert_allclose(np.asarray(extra["r1"]), np.asarray(r_ref[:, 0:1]),
                               rtol=0, atol=2e-2)
    np.testing.assert_allclose(np.asarray(extra["r2"]), np.asarray(r_ref[:, 1:2]),
                               rtol=0, atol=2e-2)

    print("KERNEL_OK")
</pallas_src>

<mosaic_0001>
module attributes {stable_mosaic.version = 11 : i64} {
  func.func @_hydra_kernel(%arg0: i32, %arg1: memref<8x256xf32, #tpu.memory_space<vmem>>, %arg2: memref<48x2xf32, #tpu.memory_space<vmem>>, %arg3: memref<128x8xbf16, #tpu.memory_space<vmem>>, %arg4: memref<128x48xbf16, #tpu.memory_space<vmem>>, %arg5: memref<128x128xbf16, #tpu.memory_space<vmem>>, %arg6: memref<128x1xf32, #tpu.memory_space<vmem>>, %arg7: memref<8x128xbf16, #tpu.memory_space<vmem>>, %arg8: memref<8x2xf32, #tpu.memory_space<vmem>>, %arg9: memref<8x256xf32, #tpu.memory_space<vmem>>) attributes {dimension_semantics = [#tpu.dimension_semantics<parallel>], iteration_bounds = array<i64: 1>, scalar_prefetch = 0 : i64, scratch_operands = 0 : i64, tpu.core_type = #tpu.core_type<tc>, window_params = [{transform_indices = @transform_0, window_bounds = array<i64: 8, 256>}, {pipeline_mode = #tpu.pipeline_mode<synchronous>, transform_indices = @transform_1, window_bounds = array<i64: 48, 2>}, {pipeline_mode = #tpu.pipeline_mode<synchronous>, transform_indices = @transform_2, window_bounds = array<i64: 128, 8>}, {pipeline_mode = #tpu.pipeline_mode<synchronous>, transform_indices = @transform_3, window_bounds = array<i64: 128, 48>}, {pipeline_mode = #tpu.pipeline_mode<synchronous>, transform_indices = @transform_4, window_bounds = array<i64: 128, 128>}, {pipeline_mode = #tpu.pipeline_mode<synchronous>, transform_indices = @transform_5, window_bounds = array<i64: 128, 1>}, {pipeline_mode = #tpu.pipeline_mode<synchronous>, transform_indices = @transform_6, window_bounds = array<i64: 8, 128>}, {pipeline_mode = #tpu.pipeline_mode<synchronous>, transform_indices = @transform_7, window_bounds = array<i64: 8, 2>}, {transform_indices = @transform_8, window_bounds = array<i64: 8, 256>}]} {
    %c0 = arith.constant 0 : index
    %c0_0 = arith.constant 0 : index
    %0 = vector.load %arg1[%c0, %c0_0] : memref<8x256xf32, #tpu.memory_space<vmem>>, vector<8x256xf32>
    %1 = vector.extract_strided_slice %0 {offsets = [0, 0], sizes = [4, 256], strides = [1, 1]} : vector<8x256xf32> to vector<4x256xf32>
    %c0_1 = arith.constant 0 : index
    %c0_2 = arith.constant 0 : index
    %2 = vector.load %arg2[%c0_1, %c0_2] : memref<48x2xf32, #tpu.memory_space<vmem>>, vector<48x1xf32>
    %c0_3 = arith.constant 0 : index
    %c1 = arith.constant 1 : index
    %3 = vector.load %arg2[%c0_3, %c1] : memref<48x2xf32, #tpu.memory_space<vmem>>, vector<48x1xf32>
    %4 = tpu.concatenate %1, %1 in 0 : vector<4x256xf32>, vector<4x256xf32> -> vector<8x256xf32>
    %5 = tpu.concatenate %4, %4, %4, %4, %4, %4 in 0 : vector<8x256xf32>, vector<8x256xf32>, vector<8x256xf32>, vector<8x256xf32>, vector<8x256xf32>, vector<8x256xf32> -> vector<48x256xf32>
    %6 = vector.broadcast %2 : vector<48x1xf32> to vector<48x256xf32>
    %7 = arith.mulf %5, %6 : vector<48x256xf32>
    %8 = vector.broadcast %3 : vector<48x1xf32> to vector<48x256xf32>
    %9 = arith.addf %7, %8 : vector<48x256xf32>
    %10 = math.sin %9 : vector<48x256xf32>
    %c0_4 = arith.constant 0 : index
    %c0_5 = arith.constant 0 : index
    %11 = vector.load %arg3[%c0_4, %c0_5] : memref<128x8xbf16, #tpu.memory_space<vmem>>, vector<128x8xbf16>
    %12 = arith.truncf %0 : vector<8x256xf32> to vector<8x256xbf16>
    %cst = arith.constant dense<0.000000e+00> : vector<128x256xf32>
    %13 = tpu.matmul %11, %12, %cst {dimension_numbers = #tpu.dot_dimension_numbers<[1], [0], [0], [1], [0, 0, 1, 1], [], []>} : vector<128x8xbf16>, vector<8x256xbf16>, vector<128x256xf32> -> vector<128x256xf32>
    %c0_6 = arith.constant 0 : index
    %c0_7 = arith.constant 0 : index
    %14 = vector.load %arg4[%c0_6, %c0_7] : memref<128x48xbf16, #tpu.memory_space<vmem>>, vector<128x48xbf16>
    %15 = arith.truncf %10 : vector<48x256xf32> to vector<48x256xbf16>
    %cst_8 = arith.constant dense<0.000000e+00> : vector<128x256xf32>
    %16 = tpu.matmul %14, %15, %cst_8 {dimension_numbers = #tpu.dot_dimension_numbers<[1], [0], [0], [1], [0, 0, 1, 1], [], []>} : vector<128x48xbf16>, vector<48x256xbf16>, vector<128x256xf32> -> vector<128x256xf32>
    %17 = arith.addf %13, %16 : vector<128x256xf32>
    %cst_9 = arith.constant 0.000000e+00 : f32
    %18 = vector.broadcast %cst_9 : f32 to vector<128x256xf32>
    %19 = arith.maximumf %17, %18 : vector<128x256xf32>
    %20 = arith.truncf %19 : vector<128x256xf32> to vector<128x256xbf16>
    %c0_10 = arith.constant 0 : index
    %c0_11 = arith.constant 0 : index
    %21 = vector.load %arg5[%c0_10, %c0_11] : memref<128x128xbf16, #tpu.memory_space<vmem>>, vector<128x128xbf16>
    %cst_12 = arith.constant dense<0.000000e+00> : vector<128x256xf32>
    %22 = tpu.matmul %21, %20, %cst_12 {dimension_numbers = #tpu.dot_dimension_numbers<[1], [0], [0], [1], [0, 0, 1, 1], [], []>} : vector<128x128xbf16>, vector<128x256xbf16>, vector<128x256xf32> -> vector<128x256xf32>
    %c0_13 = arith.constant 0 : index
    %c0_14 = arith.constant 0 : index
    %23 = vector.load %arg6[%c0_13, %c0_14] : memref<128x1xf32, #tpu.memory_space<vmem>>, vector<128x1xf32>
    %24 = vector.broadcast %23 : vector<128x1xf32> to vector<128x256xf32>
    %25 = arith.addf %22, %24 : vector<128x256xf32>
    %cst_15 = arith.constant 0.000000e+00 : f32
    %26 = vector.broadcast %cst_15 : f32 to vector<128x256xf32>
    %27 = arith.maximumf %25, %26 : vector<128x256xf32>
    %28 = arith.truncf %27 : vector<128x256xf32> to vector<128x256xbf16>
    %c0_16 = arith.constant 0 : index
    %c0_17 = arith.constant 0 : index
    %29 = vector.load %arg7[%c0_16, %c0_17] : memref<8x128xbf16, #tpu.memory_space<vmem>>, vector<8x128xbf16>
    %cst_18 = arith.constant dense<0.000000e+00> : vector<8x256xf32>
    %30 = tpu.matmul %29, %28, %cst_18 {dimension_numbers = #tpu.dot_dimension_numbers<[1], [0], [0], [1], [0, 0, 1, 1], [], []>} : vector<8x128xbf16>, vector<128x256xbf16>, vector<8x256xf32> -> vector<8x256xf32>
    %c0_19 = arith.constant 0 : index
    %c0_20 = arith.constant 0 : index
    %31 = vector.load %arg8[%c0_19, %c0_20] : memref<8x2xf32, #tpu.memory_space<vmem>>, vector<8x1xf32>
    %32 = vector.broadcast %31 : vector<8x1xf32> to vector<8x256xf32>
    %33 = arith.addf %30, %32 : vector<8x256xf32>
    %cst_21 = arith.constant -6.000000e+01 : f32
    %34 = vector.broadcast %cst_21 : f32 to vector<8x256xf32>
    %35 = arith.maximumf %33, %34 : vector<8x256xf32>
    %c0_22 = arith.constant 0 : index
    %c1_23 = arith.constant 1 : index
    %36 = vector.load %arg8[%c0_22, %c1_23] : memref<8x2xf32, #tpu.memory_space<vmem>>, vector<8x1xf32>
    %cst_24 = arith.constant 0.000000e+00 : f32
    %37 = vector.broadcast %cst_24 : f32 to vector<8x256xf32>
    %38 = arith.subf %37, %35 : vector<8x256xf32>
    %39 = math.exp %38 : vector<8x256xf32>
    %40 = vector.broadcast %36 : vector<8x1xf32> to vector<8x256xf32>
    %41 = arith.addf %40, %39 : vector<8x256xf32>
    %42 = tpu.reciprocal %41 {approx = true} : vector<8x256xf32> -> vector<8x256xf32>
    %c0_25 = arith.constant 0 : index
    %c0_26 = arith.constant 0 : index
    %43 = vector.load %arg9[%c0_25, %c0_26] : memref<8x256xf32, #tpu.memory_space<vmem>>, vector<8x256xf32>
    tpu.vector_store %arg9[%c0_25, %c0_26], %42 {strides = array<i32>} : memref<8x256xf32, #tpu.memory_space<vmem>>, vector<8x256xf32>,
    return
  }
  func.func @transform_0(%arg0: i32) -> (i32, i32) {
    %c0_i32 = arith.constant 0 : i32
    %c0_i32_0 = arith.constant 0 : i32
    return %c0_i32, %arg0 : i32, i32
  }
  func.func @transform_1(%arg0: i32) -> (i32, i32) {
    %c0_i32 = arith.constant 0 : i32
    %c0_i32_0 = arith.constant 0 : i32
    %c0_i32_1 = arith.constant 0 : i32
    return %c0_i32, %c0_i32_0 : i32, i32
  }
  func.func @transform_2(%arg0: i32) -> (i32, i32) {
    %c0_i32 = arith.constant 0 : i32
    %c0_i32_0 = arith.constant 0 : i32
    %c0_i32_1 = arith.constant 0 : i32
    return %c0_i32, %c0_i32_0 : i32, i32
  }
  func.func @transform_3(%arg0: i32) -> (i32, i32) {
    %c0_i32 = arith.constant 0 : i32
    %c0_i32_0 = arith.constant 0 : i32
    %c0_i32_1 = arith.constant 0 : i32
    return %c0_i32, %c0_i32_0 : i32, i32
  }
  func.func @transform_4(%arg0: i32) -> (i32, i32) {
    %c0_i32 = arith.constant 0 : i32
    %c0_i32_0 = arith.constant 0 : i32
    %c0_i32_1 = arith.constant 0 : i32
    return %c0_i32, %c0_i32_0 : i32, i32
  }
  func.func @transform_5(%arg0: i32) -> (i32, i32) {
    %c0_i32 = arith.constant 0 : i32
    %c0_i32_0 = arith.constant 0 : i32
    %c0_i32_1 = arith.constant 0 : i32
    return %c0_i32, %c0_i32_0 : i32, i32
  }
  func.func @transform_6(%arg0: i32) -> (i32, i32) {
    %c0_i32 = arith.constant 0 : i32
    %c0_i32_0 = arith.constant 0 : i32
    %c0_i32_1 = arith.constant 0 : i32
    return %c0_i32, %c0_i32_0 : i32, i32
  }
  func.func @transform_7(%arg0: i32) -> (i32, i32) {
    %c0_i32 = arith.constant 0 : i32
    %c0_i32_0 = arith.constant 0 : i32
    %c0_i32_1 = arith.constant 0 : i32
    return %c0_i32, %c0_i32_0 : i32, i32
  }
  func.func @transform_8(%arg0: i32) -> (i32, i32) {
    %c0_i32 = arith.constant 0 : i32
    %c0_i32_0 = arith.constant 0 : i32
    return %c0_i32, %arg0 : i32, i32
  }
}

</mosaic_0001>

<llo_original>
// kernel: tpu_custom_call.1
$region0: #{tpu_custom_call.1}
  #allocation0 [shape = 'u32[]', space=smem, size = 0x4, offset = 0x4, fixed_abs, tag = 'smem constant byte address 0x4 - core index']
  #allocation1 [shape = 'u32[144,128]{1,0:T(1,128)}', space=vmem, size = 0x12000, scoped, tag = 'internal scratch']
  %s0 = inlined_call_operand.vmem [shape: f32[8,256], index: 0, kind: input, shape index: {}]
  %s1 = inlined_call_operand.vmem [shape: f32[48,2], index: 1, kind: input, shape index: {}]
  %s2 = inlined_call_operand.vmem [shape: bf16[128,8], index: 2, kind: input, shape index: {}]
  %s3 = inlined_call_operand.vmem [shape: bf16[128,48], index: 3, kind: input, shape index: {}]
  %s4 = inlined_call_operand.vmem [shape: bf16[128,128], index: 4, kind: input, shape index: {}]
  %s5 = inlined_call_operand.vmem [shape: f32[128,1], index: 5, kind: input, shape index: {}]
  %s6 = inlined_call_operand.vmem [shape: bf16[8,128], index: 6, kind: input, shape index: {}]
  %s7 = inlined_call_operand.vmem [shape: f32[8,2], index: 7, kind: input, shape index: {}]
  %s8 = inlined_call_operand.hbm [shape: f32[8,256], index: 8, kind: output, shape index: {}]
  %s9 = sld [smem:[#allocation0]]
  $region42: #{tpu_custom_call.1} parent=0
    _
  %s11 = ssub.s32 1, %s9
  %s12 = scalar_select 0, %s11, %s9
  $region1: #{tpu_custom_call.1} parent=0
    #allocation2 [shape = 'u8[8192]{0}', space=vmem, size = 0x2000, scoped, tag = 'output window, operand 0, single buffered']
    #allocation3 [shape = 's32[1]{0}', space=sflag, size = 0x4, scoped, tag = 'scoped memory for tpu_custom_call.1']
    %13 = vsyncpa [#allocation3], 0
    // Predicated region
    $region2: #{tpu_custom_call.1} parent=1 // pred_check
      _
    $region3: #{tpu_custom_call.1} parent=1 // pred_check_branch
      %15 = sbr.rel (0) target = $region5
    $region4: #{tpu_custom_call.1} parent=1 // pred_region
      _
    $region5: #{tpu_custom_call.1} parent=1 // pred_fallthru
      _
    // Predicated region
    $region6: #{tpu_custom_call.1} parent=1 // pred_check
      _
    $region7: #{tpu_custom_call.1} parent=1 // pred_check_branch
      %17 = sbr.rel (0) target = $region9
    $region8: #{tpu_custom_call.1} parent=1 // pred_region
      _
    $region9: #{tpu_custom_call.1} parent=1 // pred_fallthru
      _
    // Predicated region
    $region10: #{tpu_custom_call.1} parent=1 // pred_check
      _
    $region11: #{tpu_custom_call.1} parent=1 // pred_check_branch
      %19 = sbr.rel (0) target = $region13
    $region12: #{tpu_custom_call.1} parent=1 // pred_region
      _
    $region13: #{tpu_custom_call.1} parent=1 // pred_fallthru
      _
    // Predicated region
    $region14: #{tpu_custom_call.1} parent=1 // pred_check
      _
    $region15: #{tpu_custom_call.1} parent=1 // pred_check_branch
      %21 = sbr.rel (0) target = $region17
    $region16: #{tpu_custom_call.1} parent=1 // pred_region
      _
    $region17: #{tpu_custom_call.1} parent=1 // pred_fallthru
      _
    // Predicated region
    $region18: #{tpu_custom_call.1} parent=1 // pred_check
      _
    $region19: #{tpu_custom_call.1} parent=1 // pred_check_branch
      %23 = sbr.rel (0) target = $region21
    $region20: #{tpu_custom_call.1} parent=1 // pred_region
      _
    $region21: #{tpu_custom_call.1} parent=1 // pred_fallthru
      _
    // Predicated region
    $region22: #{tpu_custom_call.1} parent=1 // pred_check
      _
    $region23: #{tpu_custom_call.1} parent=1 // pred_check_branch
      %25 = sbr.rel (0) target = $region25
    $region24: #{tpu_custom_call.1} parent=1 // pred_region
      _
    $region25: #{tpu_custom_call.1} parent=1 // pred_fallthru
      _
    // Predicated region
    $region26: #{tpu_custom_call.1} parent=1 // pred_check
      _
    $region27: #{tpu_custom_call.1} parent=1 // pred_check_branch
      %27 = sbr.rel (0) target = $region29
    $region28: #{tpu_custom_call.1} parent=1 // pred_region
      _
    $region29: #{tpu_custom_call.1} parent=1 // pred_fallthru
      _
    // Predicated region
    $region30: #{tpu_custom_call.1} parent=1 // pred_check
      _
    $region31: #{tpu_custom_call.1} parent=1 // pred_check_branch
      %29 = sbr.rel (0) target = $region33
    $region32: #{tpu_custom_call.1} parent=1 // pred_region
      _
    $region33: #{tpu_custom_call.1} parent=1 // pred_fallthru
      _
    %v31 = vld [vmem:[%s0] sm:$0xff]
    %v32 = vld [vmem:[%s0 + $0x8] sm:$0xff]
    %v33 = vld [vmem:[%s1] sm:$0xff]
    %v34 = vld [vmem:[%s1 + $0x8] sm:$0xff]
    %v35 = vld [vmem:[%s1 + $0x10] sm:$0xff]
    %v36 = vld [vmem:[%s1 + $0x18] sm:$0xff]
    %v37 = vld [vmem:[%s1 + $0x20] sm:$0xff]
    %v38 = vld [vmem:[%s1 + $0x28] sm:$0xff]
    %v41 = vrot.slane %v31, 4
    %v42 = vrot.slane %v32, 4
    %vm45 = vcmask 1043456
    %v46 = vsel %vm45, %v31, %v41
    %v47 = vsel %vm45, %v32, %v42
    %49 = vset.pattern.permute.xlu0 0
    %50 = vperm.xlu0 %49, %v33
    %v51 = vpop.permute.xlu0 %50
    %54 = vset.pattern.permute.xlu0 0
    %55 = vperm.xlu0 %54, %v34
    %v56 = vpop.permute.xlu0 %55
    %59 = vset.pattern.permute.xlu0 0
    %60 = vperm.xlu0 %59, %v35
    %v61 = vpop.permute.xlu0 %60
    %64 = vset.pattern.permute.xlu0 0
    %65 = vperm.xlu0 %64, %v36
    %v66 = vpop.permute.xlu0 %65
    %69 = vset.pattern.permute.xlu0 0
    %70 = vperm.xlu0 %69, %v37
    %v71 = vpop.permute.xlu0 %70
    %74 = vset.pattern.permute.xlu0 0
    %75 = vperm.xlu0 %74, %v38
    %v76 = vpop.permute.xlu0 %75
    %v78 = vmul.f32 %v46, %v51
    %v79 = vmul.f32 %v47, %v51
    %v80 = vmul.f32 %v46, %v56
    %v81 = vmul.f32 %v47, %v56
    %v82 = vmul.f32 %v46, %v61
    %v83 = vmul.f32 %v47, %v61
    %v84 = vmul.f32 %v46, %v66
    %v85 = vmul.f32 %v47, %v66
    %v86 = vmul.f32 %v46, %v71
    %v87 = vmul.f32 %v47, %v71
    %v88 = vmul.f32 %v46, %v76
    %v89 = vmul.f32 %v47, %v76
    %90 = vset.pattern.permute.xlu0 1
    %91 = vperm.xlu0 %90, %v33
    %v92 = vpop.permute.xlu0 %91
    %94 = vset.pattern.permute.xlu0 1
    %95 = vperm.xlu0 %94, %v34
    %v96 = vpop.permute.xlu0 %95
    %98 = vset.pattern.permute.xlu0 1
    %99 = vperm.xlu0 %98, %v35
    %v100 = vpop.permute.xlu0 %99
    %102 = vset.pattern.permute.xlu0 1
    %103 = vperm.xlu0 %102, %v36
    %v104 = vpop.permute.xlu0 %103
    %106 = vset.pattern.permute.xlu0 1
    %107 = vperm.xlu0 %106, %v37
    %v108 = vpop.permute.xlu0 %107
    %110 = vset.pattern.permute.xlu0 1
    %111 = vperm.xlu0 %110, %v38
    %v112 = vpop.permute.xlu0 %111
    %v114 = vadd.f32 %v78, %v92
    %v115 = vadd.f32 %v79, %v92
    %v116 = vadd.f32 %v80, %v96
    %v117 = vadd.f32 %v81, %v96
    %v118 = vadd.f32 %v82, %v100
    %v119 = vadd.f32 %v83, %v100
    %v120 = vadd.f32 %v84, %v104
    %v121 = vadd.f32 %v85, %v104
    %v122 = vadd.f32 %v86, %v108
    %v123 = vadd.f32 %v87, %v108
    %v124 = vadd.f32 %v88, %v112
    %v125 = vadd.f32 %v89, %v112
    %v126 = vand.u32 2147483647, %v114
    %vm127 = vcmp.le.f32.partialorder %v126, 0.7853982
    %vm128 = vcmp.lt.s32.totalorder %v114, 0
    %v129 = vand.u32 %v114, 2139095040
    %v130 = vshrl.u32 %v129, 23
    %v131 = vsub.s32 %v130, 127
    %v132 = vand.u32 2147483647, %v114
    %v133 = vand.u32 %v132, 8388607
    %v134 = vor.u32 %v133, 8388608
    %v135 = vsub.s32 0, %v134
    %v136 = vadd.s32 %v131, 1
    %vm137 = vcmp.gt.s32.totalorder %v136, 0
    %v138 = vsel %vm137, %v136, 0
    %v139 = vshrl.u32 %v138, 5
    %v140 = vand.u32 %v138, 31
    %v141 = vsub.s32 32, %v140
    %v142 = vshrl.u32 683565275, %v141
    %v143 = vshll.u32 683565275, %v140
    %v144 = vshrl.u32 2475754826, %v141
    %v145 = vor.u32 %v143, %v144
    %v146 = vshll.u32 2475754826, %v140
    %v147 = vshrl.u32 2131351028, %v141
    %v148 = vor.u32 %v146, %v147
    %v149 = vshll.u32 2131351028, %v140
    %v150 = vshrl.u32 2102212464, %v141
    %v151 = vor.u32 %v149, %v150
    %v152 = vshll.u32 2102212464, %v140
    %v153 = vshrl.u32 920167782, %v141
    %v154 = vor.u32 %v152, %v153
    %v155 = vshll.u32 920167782, %v140
    %v156 = vshrl.u32 1326507024, %v141
    %v157 = vor.u32 %v155, %v156
    %vm158 = vcmp.lt.s32.totalorder %v139, 1
    %vm159 = vcmp.lt.s32.totalorder %v139, 2
    %vm160 = vcmp.lt.s32.totalorder %v139, 3
    %vm161 = vcmp.lt.s32.totalorder %v139, 4
    %v162 = vsel %vm158, %v142, %v145
    %v163 = vsel %vm161, %v151, 2102212464
    %v164 = vsel %vm160, %v148, %v163
    %v165 = vsel %vm159, %v162, %v164
    %v166 = vsel %vm158, %v145, %v148
    %v167 = vsel %vm161, %v154, 920167782
    %v168 = vsel %vm160, %v151, %v167
    %v169 = vsel %vm159, %v166, %v168
    %v170 = vsel %vm158, %v148, %v151
    %v171 = vsel %vm161, %v157, 1326507024
    %v172 = vsel %vm160, %v154, %v171
    %v173 = vsel %vm159, %v170, %v172
    %v174 = vshll.u32 %v134, 8
    %v175 = vmul.u32.u64.compose %v174, %v173
    %v176 = vextract.low.u32 %v175
    %v177 = vextract.high.u32 %v175
    %v178 = vmul.u32.u64.compose %v174, %v169
    %v179 = vextract.low.u32 %v178
    %v180 = vextract.high.u32 %v178
    %v181 = vmul.u32 %v174, %v165
    %v182 = vadd.s32 %v177, %v179
    %vm183 = vc.u32 %v177, %v179
    %v184 = vadd.s32 %v180, 1
    %v185 = vsel %vm183, %v184, %v180
    %v186 = vadd.s32 %v181, %v185
    %v187 = vadd.s32 %v186, 536870912
    %v188 = vshrl.u32 %v187, 30
    %v189 = vshll.u32 %v188, 30
    %v190 = vsub.s32 %v186, %v189
    %vm191 = vcmp.lt.s32.totalorder %v190, 0
    %v192 = vsub.s32 0, %v190
    %v193 = vsel %vm191, %v192, %v190
    %v194 = vclz %v193
    %v195 = vsub.s32 %v194, 2
    %vm196 = vcmp.gt.s32.totalorder 0, %v195
    %v197 = vsel %vm196, 0, %v195
    %v198 = vsub.s32 32, %v197
    %v199 = vshll.u32 %v190, %v197
    %v200 = vshrl.u32 %v182, %v198
    %v201 = vor.u32 %v199, %v200
    %v202 = vsub.s32 4294967266, %v197
    %v203 = vadd.s32 %v202, 127
    %v204 = vshll.u32 %v203, 23
    %v205 = vor.u32 4788187, %v204
    %v206 = vand.u32 2147483647, %v205
    %v208 = vcvt.s32.f32 %v201
    %v209 = vmul.f32 %v208, %v206
    %v210 = vxor.u32 %v209, 2147483648
    %v211 = vsel %vm128, %v210, %v209
    %v212 = vsub.s32 4, %v188
    %v213 = vsel %vm128, %v212, %v188
    %v214 = vsel %vm127, %v114, %v211
    %v215 = vsel %vm127, 0, %v213
    %v216 = vcosq.f32.pop %v214
    %v217 = vsinq.f32.pop %v214
    %vm218 = vweird.f32 %v114
    %v219 = vadd.s32 %v215, 3
    %v220 = vand.u32 %v219, 3
    %vm221 = vcmp.lt.s32.totalorder %v220, 2
    %vm222 = vcmp.eq.s32.totalorder %v220, 0
    %v223 = vxor.u32 %v217, 2147483648
    %v224 = vsel %vm222, %v216, %v223
    %vm225 = vcmp.eq.s32.totalorder %v220, 2
    %v226 = vxor.u32 %v216, 2147483648
    %v227 = vsel %vm225, %v226, %v217
    %v228 = vsel %vm221, %v224, %v227
    %v229 = vsel %vm218, nan, %v228
    %v230 = vand.u32 2147483647, %v115
    %vm231 = vcmp.le.f32.partialorder %v230, 0.7853982
    %vm232 = vcmp.lt.s32.totalorder %v115, 0
    %v233 = vand.u32 %v115, 2139095040
    %v234 = vshrl.u32 %v233, 23
    %v235 = vsub.s32 %v234, 127
    %v236 = vand.u32 2147483647, %v115
    %v237 = vand.u32 %v236, 8388607
    %v238 = vor.u32 %v237, 8388608
    %v239 = vsub.s32 0, %v238
    %v240 = vadd.s32 %v235, 1
    %vm241 = vcmp.gt.s32.totalorder %v240, 0
    %v242 = vsel %vm241, %v240, 0
    %v243 = vshrl.u32 %v242, 5
    %v244 = vand.u32 %v242, 31
    %v245 = vsub.s32 32, %v244
    %v246 = vshrl.u32 683565275, %v245
    %v247 = vshll.u32 683565275, %v244
    %v248 = vshrl.u32 2475754826, %v245
    %v249 = vor.u32 %v247, %v248
    %v250 = vshll.u32 2475754826, %v244
    %v251 = vshrl.u32 2131351028, %v245
    %v252 = vor.u32 %v250, %v251
    %v253 = vshll.u32 2131351028, %v244
    %v254 = vshrl.u32 2102212464, %v245
    %v255 = vor.u32 %v253, %v254
    %v256 = vshll.u32 2102212464, %v244
    %v257 = vshrl.u32 920167782, %v245
    %v258 = vor.u32 %v256, %v257
    %v259 = vshll.u32 920167782, %v244
    %v260 = vshrl.u32 1326507024, %v245
    %v261 = vor.u32 %v259, %v260
    %vm262 = vcmp.lt.s32.totalorder %v243, 1
    %vm263 = vcmp.lt.s32.totalorder %v243, 2
    %vm264 = vcmp.lt.s32.totalorder %v243, 3
    %vm265 = vcmp.lt.s32.totalorder %v243, 4
    %v266 = vsel %vm262, %v246, %v249
    %v267 = vsel %vm265, %v255, 2102212464
    %v268 = vsel %vm264, %v252, %v267
    %v269 = vsel %vm263, %v266, %v268
    %v270 = vsel %vm262, %v249, %v252
    %v271 = vsel %vm265, %v258, 920167782
    %v272 = vsel %vm264, %v255, %v271
    %v273 = vsel %vm263, %v270, %v272
    %v274 = vsel %vm262, %v252, %v255
    %v275 = vsel %vm265, %v261, 1326507024
    %v276 = vsel %vm264, %v258, %v275
    %v277 = vsel %vm263, %v274, %v276
    %v278 = vshll.u32 %v238, 8
    %v279 = vmul.u32.u64.compose %v278, %v277
    %v280 = vextract.low.u32 %v279
    %v281 = vextract.high.u32 %v279
    %v282 = vmul.u32.u64.compose %v278, %v273
    %v283 = vextract.low.u32 %v282
    %v284 = vextract.high.u32 %v282
    %v285 = vmul.u32 %v278, %v269
    %v286 = vadd.s32 %v281, %v283
    %vm287 = vc.u32 %v281, %v283
    %v288 = vadd.s32 %v284, 1
    %v289 = vsel %vm287, %v288, %v284
    %v290 = vadd.s32 %v285, %v289
    %v291 = vadd.s32 %v290, 536870912
    %v292 = vshrl.u32 %v291, 30
    %v293 = vshll.u32 %v292, 30
    %v294 = vsub.s32 %v290, %v293
    %vm295 = vcmp.lt.s32.totalorder %v294, 0
    %v296 = vsub.s32 0, %v294
    %v297 = vsel %vm295, %v296, %v294
    %v298 = vclz %v297
    %v299 = vsub.s32 %v298, 2
    %vm300 = vcmp.gt.s32.totalorder 0, %v299
    %v301 = vsel %vm300, 0, %v299
    %v302 = vsub.s32 32, %v301
    %v303 = vshll.u32 %v294, %v301
    %v304 = vshrl.u32 %v286, %v302
    %v305 = vor.u32 %v303, %v304
    %v306 = vsub.s32 4294967266, %v301
    %v307 = vadd.s32 %v306, 127
    %v308 = vshll.u32 %v307, 23
    %v309 = vor.u32 4788187, %v308
    %v310 = vand.u32 2147483647, %v309
    %v312 = vcvt.s32.f32 %v305
    %v313 = vmul.f32 %v312, %v310
    %v314 = vxor.u32 %v313, 2147483648
    %v315 = vsel %vm232, %v314, %v313
    %v316 = vsub.s32 4, %v292
    %v317 = vsel %vm232, %v316, %v292
    %v318 = vsel %vm231, %v115, %v315
    %v319 = vsel %vm231, 0, %v317
    %v320 = vcosq.f32.pop %v318
    %v321 = vsinq.f32.pop %v318
    %vm322 = vweird.f32 %v115
    %v323 = vadd.s32 %v319, 3
    %v324 = vand.u32 %v323, 3
    %vm325 = vcmp.lt.s32.totalorder %v324, 2
    %vm326 = vcmp.eq.s32.totalorder %v324, 0
    %v327 = vxor.u32 %v321, 2147483648
    %v328 = vsel %vm326, %v320, %v327
    %vm329 = vcmp.eq.s32.totalorder %v324, 2
    %v330 = vxor.u32 %v320, 2147483648
    %v331 = vsel %vm329, %v330, %v321
    %v332 = vsel %vm325, %v328, %v331
    %v333 = vsel %vm322, nan, %v332
    %v334 = vand.u32 2147483647, %v116
    %vm335 = vcmp.le.f32.partialorder %v334, 0.7853982
    %vm336 = vcmp.lt.s32.totalorder %v116, 0
    %v337 = vand.u32 %v116, 2139095040
    %v338 = vshrl.u32 %v337, 23
    %v339 = vsub.s32 %v338, 127
    %v340 = vand.u32 2147483647, %v116
    %v341 = vand.u32 %v340, 8388607
    %v342 = vor.u32 %v341, 8388608
    %v343 = vsub.s32 0, %v342
    %v344 = vadd.s32 %v339, 1
    %vm345 = vcmp.gt.s32.totalorder %v344, 0
    %v346 = vsel %vm345, %v344, 0
    %v347 = vshrl.u32 %v346, 5
    %v348 = vand.u32 %v346, 31
    %v349 = vsub.s32 32, %v348
    %v350 = vshrl.u32 683565275, %v349
    %v351 = vshll.u32 683565275, %v348
    %v352 = vshrl.u32 2475754826, %v349
    %v353 = vor.u32 %v351, %v352
    %v354 = vshll.u32 2475754826, %v348
    %v355 = vshrl.u32 2131351028, %v349
    %v356 = vor.u32 %v354, %v355
    %v357 = vshll.u32 2131351028, %v348
    %v358 = vshrl.u32 2102212464, %v349
    %v359 = vor.u32 %v357, %v358
    %v360 = vshll.u32 2102212464, %v348
    %v361 = vshrl.u32 920167782, %v349
    %v362 = vor.u32 %v360, %v361
    %v363 = vshll.u32 920167782, %v348
    %v364 = vshrl.u32 1326507024, %v349
    %v365 = vor.u32 %v363, %v364
    %vm366 = vcmp.lt.s32.totalorder %v347, 1
    %vm367 = vcmp.lt.s32.totalorder %v347, 2
    %vm368 = vcmp.lt.s32.totalorder %v347, 3
    %vm369 = vcmp.lt.s32.totalorder %v347, 4
    %v370 = vsel %vm366, %v350, %v353
    %v371 = vsel %vm369, %v359, 2102212464
    %v372 = vsel %vm368, %v356, %v371
    %v373 = vsel %vm367, %v370, %v372
    %v374 = vsel %vm366, %v353, %v356
    %v375 = vsel %vm369, %v362, 920167782
    %v376 = vsel %vm368, %v359, %v375
    %v377 = vsel %vm367, %v374, %v376
    %v378 = vsel %vm366, %v356, %v359
    %v379 = vsel %vm369, %v365, 1326507024
    %v380 = vsel %vm368, %v362, %v379
    %v381 = vsel %vm367, %v378, %v380
    %v382 = vshll.u32 %v342, 8
    %v383 = vmul.u32.u64.compose %v382, %v381
    %v384 = vextract.low.u32 %v383
    %v385 = vextract.high.u32 %v383
    %v386 = vmul.u32.u64.compose %v382, %v377
    %v387 = vextract.low.u32 %v386
    %v388 = vextract.high.u32 %v386
    %v389 = vmul.u32 %v382, %v373
    %v390 = vadd.s32 %v385, %v387
    %vm391 = vc.u32 %v385, %v387
    %v392 = vadd.s32 %v388, 1
    %v393 = vsel %vm391, %v392, %v388
    %v394 = vadd.s32 %v389, %v393
    %v395 = vadd.s32 %v394, 536870912
    %v396 = vshrl.u32 %v395, 30
    %v397 = vshll.u32 %v396, 30
    %v398 = vsub.s32 %v394, %v397
    %vm399 = vcmp.lt.s32.totalorder %v398, 0
    %v400 = vsub.s32 0, %v398
    %v401 = vsel %vm399, %v400, %v398
    %v402 = vclz %v401
    %v403 = vsub.s32 %v402, 2
    %vm404 = vcmp.gt.s32.totalorder 0, %v403
    %v405 = vsel %vm404, 0, %v403
    %v406 = vsub.s32 32, %v405
    %v407 = vshll.u32 %v398, %v405
    %v408 = vshrl.u32 %v390, %v406
    %v409 = vor.u32 %v407, %v408
    %v410 = vsub.s32 4294967266, %v405
    %v411 = vadd.s32 %v410, 127
    %v412 = vshll.u32 %v411, 23
    %v413 = vor.u32 4788187, %v412
    %v414 = vand.u32 2147483647, %v413
    %v416 = vcvt.s32.f32 %v409
    %v417 = vmul.f32 %v416, %v414
    %v418 = vxor.u32 %v417, 2147483648
    %v419 = vsel %vm336, %v418, %v417
    %v420 = vsub.s32 4, %v396
    %v421 = vsel %vm336, %v420, %v396
    %v422 = vsel %vm335, %v116, %v419
    %v423 = vsel %vm335, 0, %v421
    %v424 = vcosq.f32.pop %v422
    %v425 = vsinq.f32.pop %v422
    %vm426 = vweird.f32 %v116
    %v427 = vadd.s32 %v423, 3
    %v428 = vand.u32 %v427, 3
    %vm429 = vcmp.lt.s32.totalorder %v428, 2
    %vm430 = vcmp.eq.s32.totalorder %v428, 0
    %v431 = vxor.u32 %v425, 2147483648
    %v432 = vsel %vm430, %v424, %v431
    %vm433 = vcmp.eq.s32.totalorder %v428, 2
    %v434 = vxor.u32 %v424, 2147483648
    %v435 = vsel %vm433, %v434, %v425
    %v436 = vsel %vm429, %v432, %v435
    %v437 = vsel %vm426, nan, %v436
    %v438 = vand.u32 2147483647, %v117
    %vm439 = vcmp.le.f32.partialorder %v438, 0.7853982
    %vm440 = vcmp.lt.s32.totalorder %v117, 0
    %v441 = vand.u32 %v117, 2139095040
    %v442 = vshrl.u32 %v441, 23
    %v443 = vsub.s32 %v442, 127
    %v444 = vand.u32 2147483647, %v117
    %v445 = vand.u32 %v444, 8388607
    %v446 = vor.u32 %v445, 8388608
    %v447 = vsub.s32 0, %v446
    %v448 = vadd.s32 %v443, 1
    %vm449 = vcmp.gt.s32.totalorder %v448, 0
    %v450 = vsel %vm449, %v448, 0
    %v451 = vshrl.u32 %v450, 5
    %v452 = vand.u32 %v450, 31
    %v453 = vsub.s32 32, %v452
    %v454 = vshrl.u32 683565275, %v453
    %v455 = vshll.u32 683565275, %v452
    %v456 = vshrl.u32 2475754826, %v453
    %v457 = vor.u32 %v455, %v456
    %v458 = vshll.u32 2475754826, %v452
    %v459 = vshrl.u32 2131351028, %v453
    %v460 = vor.u32 %v458, %v459
    %v461 = vshll.u32 2131351028, %v452
    %v462 = vshrl.u32 2102212464, %v453
    %v463 = vor.u32 %v461, %v462
    %v464 = vshll.u32 2102212464, %v452
    %v465 = vshrl.u32 920167782, %v453
    %v466 = vor.u32 %v464, %v465
    %v467 = vshll.u32 920167782, %v452
    %v468 = vshrl.u32 1326507024, %v453
    %v469 = vor.u32 %v467, %v468
    %vm470 = vcmp.lt.s32.totalorder %v451, 1
    %vm471 = vcmp.lt.s32.totalorder %v451, 2
    %vm472 = vcmp.lt.s32.totalorder %v451, 3
    %vm473 = vcmp.lt.s32.totalorder %v451, 4
    %v474 = vsel %vm470, %v454, %v457
    %v475 = vsel %vm473, %v463, 2102212464
    %v476 = vsel %vm472, %v460, %v475
    %v477 = vsel %vm471, %v474, %v476
    %v478 = vsel %vm470, %v457, %v460
    %v479 = vsel %vm473, %v466, 920167782
    %v480 = vsel %vm472, %v463, %v479
    %v481 = vsel %vm471, %v478, %v480
    %v482 = vsel %vm470, %v460, %v463
    %v483 = vsel %vm473, %v469, 1326507024
    %v484 = vsel %vm472, %v466, %v483
    %v485 = vsel %vm471, %v482, %v484
    %v486 = vshll.u32 %v446, 8
    %v487 = vmul.u32.u64.compose %v486, %v485
    %v488 = vextract.low.u32 %v487
    %v489 = vextract.high.u32 %v487
    %v490 = vmul.u32.u64.compose %v486, %v481
    %v491 = vextract.low.u32 %v490
    %v492 = vextract.high.u32 %v490
    %v493 = vmul.u32 %v486, %v477
    %v494 = vadd.s32 %v489, %v491
    %vm495 = vc.u32 %v489, %v491
    %v496 = vadd.s32 %v492, 1
    %v497 = vsel %vm495, %v496, %v492
    %v498 = vadd.s32 %v493, %v497
    %v499 = vadd.s32 %v498, 536870912
    %v500 = vshrl.u32 %v499, 30
    %v501 = vshll.u32 %v500, 30
    %v502 = vsub.s32 %v498, %v501
    %vm503 = vcmp.lt.s32.totalorder %v502, 0
    %v504 = vsub.s32 0, %v502
    %v505 = vsel %vm503, %v504, %v502
    %v506 = vclz %v505
    %v507 = vsub.s32 %v506, 2
    %vm508 = vcmp.gt.s32.totalorder 0, %v507
    %v509 = vsel %vm508, 0, %v507
    %v510 = vsub.s32 32, %v509
    %v511 = vshll.u32 %v502, %v509
    %v512 = vshrl.u32 %v494, %v510
    %v513 = vor.u32 %v511, %v512
    %v514 = vsub.s32 4294967266, %v509
    %v515 = vadd.s32 %v514, 127
    %v516 = vshll.u32 %v515, 23
    %v517 = vor.u32 4788187, %v516
    %v518 = vand.u32 2147483647, %v517
    %v520 = vcvt.s32.f32 %v513
    %v521 = vmul.f32 %v520, %v518
    %v522 = vxor.u32 %v521, 2147483648
    %v523 = vsel %vm440, %v522, %v521
    %v524 = vsub.s32 4, %v500
    %v525 = vsel %vm440, %v524, %v500
    %v526 = vsel %vm439, %v117, %v523
    %v527 = vsel %vm439, 0, %v525
    %v528 = vcosq.f32.pop %v526
    %v529 = vsinq.f32.pop %v526
    %vm530 = vweird.f32 %v117
    %v531 = vadd.s32 %v527, 3
    %v532 = vand.u32 %v531, 3
    %vm533 = vcmp.lt.s32.totalorder %v532, 2
    %vm534 = vcmp.eq.s32.totalorder %v532, 0
    %v535 = vxor.u32 %v529, 2147483648
    %v536 = vsel %vm534, %v528, %v535
    %vm537 = vcmp.eq.s32.totalorder %v532, 2
    %v538 = vxor.u32 %v528, 2147483648
    %v539 = vsel %vm537, %v538, %v529
    %v540 = vsel %vm533, %v536, %v539
    %v541 = vsel %vm530, nan, %v540
    %v542 = vand.u32 2147483647, %v118
    %vm543 = vcmp.le.f32.partialorder %v542, 0.7853982
    %vm544 = vcmp.lt.s32.totalorder %v118, 0
    %v545 = vand.u32 %v118, 2139095040
    %v546 = vshrl.u32 %v545, 23
    %v547 = vsub.s32 %v546, 127
    %v548 = vand.u32 2147483647, %v118
    %v549 = vand.u32 %v548, 8388607
    %v550 = vor.u32 %v549, 8388608
    %v551 = vsub.s32 0, %v550
    %v552 = vadd.s32 %v547, 1
    %vm553 = vcmp.gt.s32.totalorder %v552, 0
    %v554 = vsel %vm553, %v552, 0
    %v555 = vshrl.u32 %v554, 5
    %v556 = vand.u32 %v554, 31
    %v557 = vsub.s32 32, %v556
    %v558 = vshrl.u32 683565275, %v557
    %v559 = vshll.u32 683565275, %v556
    %v560 = vshrl.u32 2475754826, %v557
    %v561 = vor.u32 %v559, %v560
    %v562 = vshll.u32 2475754826, %v556
    %v563 = vshrl.u32 2131351028, %v557
    %v564 = vor.u32 %v562, %v563
    %v565 = vshll.u32 2131351028, %v556
    %v566 = vshrl.u32 2102212464, %v557
    %v567 = vor.u32 %v565, %v566
    %v568 = vshll.u32 2102212464, %v556
    %v569 = vshrl.u32 920167782, %v557
    %v570 = vor.u32 %v568, %v569
    %v571 = vshll.u32 920167782, %v556
    %v572 = vshrl.u32 1326507024, %v557
    %v573 = vor.u32 %v571, %v572
    %vm574 = vcmp.lt.s32.totalorder %v555, 1
    %vm575 = vcmp.lt.s32.totalorder %v555, 2
    %vm576 = vcmp.lt.s32.totalorder %v555, 3
    %vm577 = vcmp.lt.s32.totalorder %v555, 4
    %v578 = vsel %vm574, %v558, %v561
    %v579 = vsel %vm577, %v567, 2102212464
    %v580 = vsel %vm576, %v564, %v579
    %v581 = vsel %vm575, %v578, %v580
    %v582 = vsel %vm574, %v561, %v564
    %v583 = vsel %vm577, %v570, 920167782
    %v584 = vsel %vm576, %v567, %v583
    %v585 = vsel %vm575, %v582, %v584
    %v586 = vsel %vm574, %v564, %v567
    %v587 = vsel %vm577, %v573, 1326507024
    %v588 = vsel %vm576, %v570, %v587
    %v589 = vsel %vm575, %v586, %v588
    %v590 = vshll.u32 %v550, 8
    %v591 = vmul.u32.u64.compose %v590, %v589
    %v592 = vextract.low.u32 %v591
    %v593 = vextract.high.u32 %v591
    %v594 = vmul.u32.u64.compose %v590, %v585
    %v595 = vextract.low.u32 %v594
    %v596 = vextract.high.u32 %v594
    %v597 = vmul.u32 %v590, %v581
    %v598 = vadd.s32 %v593, %v595
    %vm599 = vc.u32 %v593, %v595
    %v600 = vadd.s32 %v596, 1
    %v601 = vsel %vm599, %v600, %v596
    %v602 = vadd.s32 %v597, %v601
    %v603 = vadd.s32 %v602, 536870912
    %v604 = vshrl.u32 %v603, 30
    %v605 = vshll.u32 %v604, 30
    %v606 = vsub.s32 %v602, %v605
    %vm607 = vcmp.lt.s32.totalorder %v606, 0
    %v608 = vsub.s32 0, %v606
    %v609 = vsel %vm607, %v608, %v606
    %v610 = vclz %v609
    %v611 = vsub.s32 %v610, 2
    %vm612 = vcmp.gt.s32.totalorder 0, %v611
    %v613 = vsel %vm612, 0, %v611
    %v614 = vsub.s32 32, %v613
    %v615 = vshll.u32 %v606, %v613
    %v616 = vshrl.u32 %v598, %v614
    %v617 = vor.u32 %v615, %v616
    %v618 = vsub.s32 4294967266, %v613
    %v619 = vadd.s32 %v618, 127
    %v620 = vshll.u32 %v619, 23
    %v621 = vor.u32 4788187, %v620
    %v622 = vand.u32 2147483647, %v621
    %v624 = vcvt.s32.f32 %v617
    %v625 = vmul.f32 %v624, %v622
    %v626 = vxor.u32 %v625, 2147483648
    %v627 = vsel %vm544, %v626, %v625
    %v628 = vsub.s32 4, %v604
    %v629 = vsel %vm544, %v628, %v604
    %v630 = vsel %vm543, %v118, %v627
    %v631 = vsel %vm543, 0, %v629
    %v632 = vcosq.f32.pop %v630
    %v633 = vsinq.f32.pop %v630
    %vm634 = vweird.f32 %v118
    %v635 = vadd.s32 %v631, 3
    %v636 = vand.u32 %v635, 3
    %vm637 = vcmp.lt.s32.totalorder %v636, 2
    %vm638 = vcmp.eq.s32.totalorder %v636, 0
    %v639 = vxor.u32 %v633, 2147483648
    %v640 = vsel %vm638, %v632, %v639
    %vm641 = vcmp.eq.s32.totalorder %v636, 2
    %v642 = vxor.u32 %v632, 2147483648
    %v643 = vsel %vm641, %v642, %v633
    %v644 = vsel %vm637, %v640, %v643
    %v645 = vsel %vm634, nan, %v644
    %v646 = vand.u32 2147483647, %v119
    %vm647 = vcmp.le.f32.partialorder %v646, 0.7853982
    %vm648 = vcmp.lt.s32.totalorder %v119, 0
    %v649 = vand.u32 %v119, 2139095040
    %v650 = vshrl.u32 %v649, 23
    %v651 = vsub.s32 %v650, 127
    %v652 = vand.u32 2147483647, %v119
    %v653 = vand.u32 %v652, 8388607
    %v654 = vor.u32 %v653, 8388608
    %v655 = vsub.s32 0, %v654
    %v656 = vadd.s32 %v651, 1
    %vm657 = vcmp.gt.s32.totalorder %v656, 0
    %v658 = vsel %vm657, %v656, 0
    %v659 = vshrl.u32 %v658, 5
    %v660 = vand.u32 %v658, 31
    %v661 = vsub.s32 32, %v660
    %v662 = vshrl.u32 683565275, %v661
    %v663 = vshll.u32 683565275, %v660
    %v664 = vshrl.u32 2475754826, %v661
    %v665 = vor.u32 %v663, %v664
    %v666 = vshll.u32 2475754826, %v660
    %v667 = vshrl.u32 2131351028, %v661
    %v668 = vor.u32 %v666, %v667
    %v669 = vshll.u32 2131351028, %v660
    %v670 = vshrl.u32 2102212464, %v661
    %v671 = vor.u32 %v669, %v670
    %v672 = vshll.u32 2102212464, %v660
    %v673 = vshrl.u32 920167782, %v661
    %v674 = vor.u32 %v672, %v673
    %v675 = vshll.u32 920167782, %v660
    %v676 = vshrl.u32 1326507024, %v661
    %v677 = vor.u32 %v675, %v676
    %vm678 = vcmp.lt.s32.totalorder %v659, 1
    %vm679 = vcmp.lt.s32.totalorder %v659, 2
    %vm680 = vcmp.lt.s32.totalorder %v659, 3
    %vm681 = vcmp.lt.s32.totalorder %v659, 4
    %v682 = vsel %vm678, %v662, %v665
    %v683 = vsel %vm681, %v671, 2102212464
    %v684 = vsel %vm680, %v668, %v683
    %v685 = vsel %vm679, %v682, %v684
    %v686 = vsel %vm678, %v665, %v668
    %v687 = vsel %vm681, %v674, 920167782
    %v688 = vsel %vm680, %v671, %v687
    %v689 = vsel %vm679, %v686, %v688
    %v690 = vsel %vm678, %v668, %v671
    %v691 = vsel %vm681, %v677, 1326507024
    %v692 = vsel %vm680, %v674, %v691
    %v693 = vsel %vm679, %v690, %v692
    %v694 = vshll.u32 %v654, 8
    %v695 = vmul.u32.u64.compose %v694, %v693
    %v696 = vextract.low.u32 %v695
    %v697 = vextract.high.u32 %v695
    %v698 = vmul.u32.u64.compose %v694, %v689
    %v699 = vextract.low.u32 %v698
    %v700 = vextract.high.u32 %v698
    %v701 = vmul.u32 %v694, %v685
    %v702 = vadd.s32 %v697, %v699
    %vm703 = vc.u32 %v697, %v699
    %v704 = vadd.s32 %v700, 1
    %v705 = vsel %vm703, %v704, %v700
    %v706 = vadd.s32 %v701, %v705
    %v707 = vadd.s32 %v706, 536870912
    %v708 = vshrl.u32 %v707, 30
    %v709 = vshll.u32 %v708, 30
    %v710 = vsub.s32 %v706, %v709
    %vm711 = vcmp.lt.s32.totalorder %v710, 0
    %v712 = vsub.s32 0, %v710
    %v713 = vsel %vm711, %v712, %v710
    %v714 = vclz %v713
    %v715 = vsub.s32 %v714, 2
    %vm716 = vcmp.gt.s32.totalorder 0, %v715
    %v717 = vsel %vm716, 0, %v715
    %v718 = vsub.s32 32, %v717
    %v719 = vshll.u32 %v710, %v717
    %v720 = vshrl.u32 %v702, %v718
    %v721 = vor.u32 %v719, %v720
    %v722 = vsub.s32 4294967266, %v717
    %v723 = vadd.s32 %v722, 127
    %v724 = vshll.u32 %v723, 23
    %v725 = vor.u32 4788187, %v724
    %v726 = vand.u32 2147483647, %v725
    %v728 = vcvt.s32.f32 %v721
    %v729 = vmul.f32 %v728, %v726
    %v730 = vxor.u32 %v729, 2147483648
    %v731 = vsel %vm648, %v730, %v729
    %v732 = vsub.s32 4, %v708
    %v733 = vsel %vm648, %v732, %v708
    %v734 = vsel %vm647, %v119, %v731
    %v735 = vsel %vm647, 0, %v733
    %v736 = vcosq.f32.pop %v734
    %v737 = vsinq.f32.pop %v734
    %vm738 = vweird.f32 %v119
    %v739 = vadd.s32 %v735, 3
    %v740 = vand.u32 %v739, 3
    %vm741 = vcmp.lt.s32.totalorder %v740, 2
    %vm742 = vcmp.eq.s32.totalorder %v740, 0
    %v743 = vxor.u32 %v737, 2147483648
    %v744 = vsel %vm742, %v736, %v743
    %vm745 = vcmp.eq.s32.totalorder %v740, 2
    %v746 = vxor.u32 %v736, 2147483648
    %v747 = vsel %vm745, %v746, %v737
    %v748 = vsel %vm741, %v744, %v747
    %v749 = vsel %vm738, nan, %v748
    %v750 = vand.u32 2147483647, %v120
    %vm751 = vcmp.le.f32.partialorder %v750, 0.7853982
    %vm752 = vcmp.lt.s32.totalorder %v120, 0
    %v753 = vand.u32 %v120, 2139095040
    %v754 = vshrl.u32 %v753, 23
    %v755 = vsub.s32 %v754, 127
    %v756 = vand.u32 2147483647, %v120
    %v757 = vand.u32 %v756, 8388607
    %v758 = vor.u32 %v757, 8388608
    %v759 = vsub.s32 0, %v758
    %v760 = vadd.s32 %v755, 1
    %vm761 = vcmp.gt.s32.totalorder %v760, 0
    %v762 = vsel %vm761, %v760, 0
    %v763 = vshrl.u32 %v762, 5
    %v764 = vand.u32 %v762, 31
    %v765 = vsub.s32 32, %v764
    %v766 = vshrl.u32 683565275, %v765
    %v767 = vshll.u32 683565275, %v764
    %v768 = vshrl.u32 2475754826, %v765
    %v769 = vor.u32 %v767, %v768
    %v770 = vshll.u32 2475754826, %v764
    %v771 = vshrl.u32 2131351028, %v765
    %v772 = vor.u32 %v770, %v771
    %v773 = vshll.u32 2131351028, %v764
    %v774 = vshrl.u32 2102212464, %v765
    %v775 = vor.u32 %v773, %v774
    %v776 = vshll.u32 2102212464, %v764
    %v777 = vshrl.u32 920167782, %v765
    %v778 = vor.u32 %v776, %v777
    %v779 = vshll.u32 920167782, %v764
    %v780 = vshrl.u32 1326507024, %v765
    %v781 = vor.u32 %v779, %v780
    %vm782 = vcmp.lt.s32.totalorder %v763, 1
    %vm783 = vcmp.lt.s32.totalorder %v763, 2
    %vm784 = vcmp.lt.s32.totalorder %v763, 3
    %vm785 = vcmp.lt.s32.totalorder %v763, 4
    %v786 = vsel %vm782, %v766, %v769
    %v787 = vsel %vm785, %v775, 2102212464
    %v788 = vsel %vm784, %v772, %v787
    %v789 = vsel %vm783, %v786, %v788
    %v790 = vsel %vm782, %v769, %v772
    %v791 = vsel %vm785, %v778, 920167782
    %v792 = vsel %vm784, %v775, %v791
    %v793 = vsel %vm783, %v790, %v792
    %v794 = vsel %vm782, %v772, %v775
    %v795 = vsel %vm785, %v781, 1326507024
    %v796 = vsel %vm784, %v778, %v795
    %v797 = vsel %vm783, %v794, %v796
    %v798 = vshll.u32 %v758, 8
    %v799 = vmul.u32.u64.compose %v798, %v797
    %v800 = vextract.low.u32 %v799
    %v801 = vextract.high.u32 %v799
    %v802 = vmul.u32.u64.compose %v798, %v793
    %v803 = vextract.low.u32 %v802
    %v804 = vextract.high.u32 %v802
    %v805 = vmul.u32 %v798, %v789
    %v806 = vadd.s32 %v801, %v803
    %vm807 = vc.u32 %v801, %v803
    %v808 = vadd.s32 %v804, 1
    %v809 = vsel %vm807, %v808, %v804
    %v810 = vadd.s32 %v805, %v809
    %v811 = vadd.s32 %v810, 536870912
    %v812 = vshrl.u32 %v811, 30
    %v813 = vshll.u32 %v812, 30
    %v814 = vsub.s32 %v810, %v813
    %vm815 = vcmp.lt.s32.totalorder %v814, 0
    %v816 = vsub.s32 0, %v814
    %v817 = vsel %vm815, %v816, %v814
    %v818 = vclz %v817
    %v819 = vsub.s32 %v818, 2
    %vm820 = vcmp.gt.s32.totalorder 0, %v819
    %v821 = vsel %vm820, 0, %v819
    %v822 = vsub.s32 32, %v821
    %v823 = vshll.u32 %v814, %v821
    %v824 = vshrl.u32 %v806, %v822
    %v825 = vor.u32 %v823, %v824
    %v826 = vsub.s32 4294967266, %v821
    %v827 = vadd.s32 %v826, 127
    %v828 = vshll.u32 %v827, 23
    %v829 = vor.u32 4788187, %v828
    %v830 = vand.u32 2147483647, %v829
    %v832 = vcvt.s32.f32 %v825
    %v833 = vmul.f32 %v832, %v830
    %v834 = vxor.u32 %v833, 2147483648
    %v835 = vsel %vm752, %v834, %v833
    %v836 = vsub.s32 4, %v812
    %v837 = vsel %vm752, %v836, %v812
    %v838 = vsel %vm751, %v120, %v835
    %v839 = vsel %vm751, 0, %v837
    %v840 = vcosq.f32.pop %v838
    %v841 = vsinq.f32.pop %v838
    %vm842 = vweird.f32 %v120
    %v843 = vadd.s32 %v839, 3
    %v844 = vand.u32 %v843, 3
    %vm845 = vcmp.lt.s32.totalorder %v844, 2
    %vm846 = vcmp.eq.s32.totalorder %v844, 0
    %v847 = vxor.u32 %v841, 2147483648
    %v848 = vsel %vm846, %v840, %v847
    %vm849 = vcmp.eq.s32.totalorder %v844, 2
    %v850 = vxor.u32 %v840, 2147483648
    %v851 = vsel %vm849, %v850, %v841
    %v852 = vsel %vm845, %v848, %v851
    %v853 = vsel %vm842, nan, %v852
    %v854 = vand.u32 2147483647, %v121
    %vm855 = vcmp.le.f32.partialorder %v854, 0.7853982
    %vm856 = vcmp.lt.s32.totalorder %v121, 0
    %v857 = vand.u32 %v121, 2139095040
    %v858 = vshrl.u32 %v857, 23
    %v859 = vsub.s32 %v858, 127
    %v860 = vand.u32 2147483647, %v121
    %v861 = vand.u32 %v860, 8388607
    %v862 = vor.u32 %v861, 8388608
    %v863 = vsub.s32 0, %v862
    %v864 = vadd.s32 %v859, 1
    %vm865 = vcmp.gt.s32.totalorder %v864, 0
    %v866 = vsel %vm865, %v864, 0
    %v867 = vshrl.u32 %v866, 5
    %v868 = vand.u32 %v866, 31
    %v869 = vsub.s32 32, %v868
    %v870 = vshrl.u32 683565275, %v869
    %v871 = vshll.u32 683565275, %v868
    %v872 = vshrl.u32 2475754826, %v869
    %v873 = vor.u32 %v871, %v872
    %v874 = vshll.u32 2475754826, %v868
    %v875 = vshrl.u32 2131351028, %v869
    %v876 = vor.u32 %v874, %v875
    %v877 = vshll.u32 2131351028, %v868
    %v878 = vshrl.u32 2102212464, %v869
    %v879 = vor.u32 %v877, %v878
    %v880 = vshll.u32 2102212464, %v868
    %v881 = vshrl.u32 920167782, %v869
    %v882 = vor.u32 %v880, %v881
    %v883 = vshll.u32 920167782, %v868
    %v884 = vshrl.u32 1326507024, %v869
    %v885 = vor.u32 %v883, %v884
    %vm886 = vcmp.lt.s32.totalorder %v867, 1
    %vm887 = vcmp.lt.s32.totalorder %v867, 2
    %vm888 = vcmp.lt.s32.totalorder %v867, 3
    %vm889 = vcmp.lt.s32.totalorder %v867, 4
    %v890 = vsel %vm886, %v870, %v873
    %v891 = vsel %vm889, %v879, 2102212464
    %v892 = vsel %vm888, %v876, %v891
    %v893 = vsel %vm887, %v890, %v892
    %v894 = vsel %vm886, %v873, %v876
    %v895 = vsel %vm889, %v882, 920167782
    %v896 = vsel %vm888, %v879, %v895
    %v897 = vsel %vm887, %v894, %v896
    %v898 = vsel %vm886, %v876, %v879
    %v899 = vsel %vm889, %v885, 1326507024
    %v900 = vsel %vm888, %v882, %v899
    %v901 = vsel %vm887, %v898, %v900
    %v902 = vshll.u32 %v862, 8
    %v903 = vmul.u32.u64.compose %v902, %v901
    %v904 = vextract.low.u32 %v903
    %v905 = vextract.high.u32 %v903
    %v906 = vmul.u32.u64.compose %v902, %v897
    %v907 = vextract.low.u32 %v906
    %v908 = vextract.high.u32 %v906
    %v909 = vmul.u32 %v902, %v893
    %v910 = vadd.s32 %v905, %v907
    %vm911 = vc.u32 %v905, %v907
    %v912 = vadd.s32 %v908, 1
    %v913 = vsel %vm911, %v912, %v908
    %v914 = vadd.s32 %v909, %v913
    %v915 = vadd.s32 %v914, 536870912
    %v916 = vshrl.u32 %v915, 30
    %v917 = vshll.u32 %v916, 30
    %v918 = vsub.s32 %v914, %v917
    %vm919 = vcmp.lt.s32.totalorder %v918, 0
    %v920 = vsub.s32 0, %v918
    %v921 = vsel %vm919, %v920, %v918
    %v922 = vclz %v921
    %v923 = vsub.s32 %v922, 2
    %vm924 = vcmp.gt.s32.totalorder 0, %v923
    %v925 = vsel %vm924, 0, %v923
    %v926 = vsub.s32 32, %v925
    %v927 = vshll.u32 %v918, %v925
    %v928 = vshrl.u32 %v910, %v926
    %v929 = vor.u32 %v927, %v928
    %v930 = vsub.s32 4294967266, %v925
    %v931 = vadd.s32 %v930, 127
    %v932 = vshll.u32 %v931, 23
    %v933 = vor.u32 4788187, %v932
    %v934 = vand.u32 2147483647, %v933
    %v936 = vcvt.s32.f32 %v929
    %v937 = vmul.f32 %v936, %v934
    %v938 = vxor.u32 %v937, 2147483648
    %v939 = vsel %vm856, %v938, %v937
    %v940 = vsub.s32 4, %v916
    %v941 = vsel %vm856, %v940, %v916
    %v942 = vsel %vm855, %v121, %v939
    %v943 = vsel %vm855, 0, %v941
    %v944 = vcosq.f32.pop %v942
    %v945 = vsinq.f32.pop %v942
    %vm946 = vweird.f32 %v121
    %v947 = vadd.s32 %v943, 3
    %v948 = vand.u32 %v947, 3
    %vm949 = vcmp.lt.s32.totalorder %v948, 2
    %vm950 = vcmp.eq.s32.totalorder %v948, 0
    %v951 = vxor.u32 %v945, 2147483648
    %v952 = vsel %vm950, %v944, %v951
    %vm953 = vcmp.eq.s32.totalorder %v948, 2
    %v954 = vxor.u32 %v944, 2147483648
    %v955 = vsel %vm953, %v954, %v945
    %v956 = vsel %vm949, %v952, %v955
    %v957 = vsel %vm946, nan, %v956
    %v958 = vand.u32 2147483647, %v122
    %vm959 = vcmp.le.f32.partialorder %v958, 0.7853982
    %vm960 = vcmp.lt.s32.totalorder %v122, 0
    %v961 = vand.u32 %v122, 2139095040
    %v962 = vshrl.u32 %v961, 23
    %v963 = vsub.s32 %v962, 127
    %v964 = vand.u32 2147483647, %v122
    %v965 = vand.u32 %v964, 8388607
    %v966 = vor.u32 %v965, 8388608
    %v967 = vsub.s32 0, %v966
    %v968 = vadd.s32 %v963, 1
    %vm969 = vcmp.gt.s32.totalorder %v968, 0
    %v970 = vsel %vm969, %v968, 0
    %v971 = vshrl.u32 %v970, 5
    %v972 = vand.u32 %v970, 31
    %v973 = vsub.s32 32, %v972
    %v974 = vshrl.u32 683565275, %v973
    %v975 = vshll.u32 683565275, %v972
    %v976 = vshrl.u32 2475754826, %v973
    %v977 = vor.u32 %v975, %v976
    %v978 = vshll.u32 2475754826, %v972
    %v979 = vshrl.u32 2131351028, %v973
    %v980 = vor.u32 %v978, %v979
    %v981 = vshll.u32 2131351028, %v972
    %v982 = vshrl.u32 2102212464, %v973
    %v983 = vor.u32 %v981, %v982
    %v984 = vshll.u32 2102212464, %v972
    %v985 = vshrl.u32 920167782, %v973
    %v986 = vor.u32 %v984, %v985
    %v987 = vshll.u32 920167782, %v972
    %v988 = vshrl.u32 1326507024, %v973
    %v989 = vor.u32 %v987, %v988
    %vm990 = vcmp.lt.s32.totalorder %v971, 1
    %vm991 = vcmp.lt.s32.totalorder %v971, 2
    %vm992 = vcmp.lt.s32.totalorder %v971, 3
    %vm993 = vcmp.lt.s32.totalorder %v971, 4
    %v994 = vsel %vm990, %v974, %v977
    %v995 = vsel %vm993, %v983, 2102212464
    %v996 = vsel %vm992, %v980, %v995
    %v997 = vsel %vm991, %v994, %v996
    %v998 = vsel %vm990, %v977, %v980
    %v999 = vsel %vm993, %v986, 920167782
    %v1000 = vsel %vm992, %v983, %v999
    %v1001 = vsel %vm991, %v998, %v1000
    %v1002 = vsel %vm990, %v980, %v983
    %v1003 = vsel %vm993, %v989, 1326507024
    %v1004 = vsel %vm992, %v986, %v1003
    %v1005 = vsel %vm991, %v1002, %v1004
    %v1006 = vshll.u32 %v966, 8
    %v1007 = vmul.u32.u64.compose %v1006, %v1005
    %v1008 = vextract.low.u32 %v1007
    %v1009 = vextract.high.u32 %v1007
    %v1010 = vmul.u32.u64.compose %v1006, %v1001
    %v1011 = vextract.low.u32 %v1010
    %v1012 = vextract.high.u32 %v1010
    %v1013 = vmul.u32 %v1006, %v997
    %v1014 = vadd.s32 %v1009, %v1011
    %vm1015 = vc.u32 %v1009, %v1011
    %v1016 = vadd.s32 %v1012, 1
    %v1017 = vsel %vm1015, %v1016, %v1012
    %v1018 = vadd.s32 %v1013, %v1017
    %v1019 = vadd.s32 %v1018, 536870912
    %v1020 = vshrl.u32 %v1019, 30
    %v1021 = vshll.u32 %v1020, 30
    %v1022 = vsub.s32 %v1018, %v1021
    %vm1023 = vcmp.lt.s32.totalorder %v1022, 0
    %v1024 = vsub.s32 0, %v1022
    %v1025 = vsel %vm1023, %v1024, %v1022
    %v1026 = vclz %v1025
    %v1027 = vsub.s32 %v1026, 2
    %vm1028 = vcmp.gt.s32.totalorder 0, %v1027
    %v1029 = vsel %vm1028, 0, %v1027
    %v1030 = vsub.s32 32, %v1029
    %v1031 = vshll.u32 %v1022, %v1029
    %v1032 = vshrl.u32 %v1014, %v1030
    %v1033 = vor.u32 %v1031, %v1032
    %v1034 = vsub.s32 4294967266, %v1029
    %v1035 = vadd.s32 %v1034, 127
    %v1036 = vshll.u32 %v1035, 23
    %v1037 = vor.u32 4788187, %v1036
    %v1038 = vand.u32 2147483647, %v1037
    %v1040 = vcvt.s32.f32 %v1033
    %v1041 = vmul.f32 %v1040, %v1038
    %v1042 = vxor.u32 %v1041, 2147483648
    %v1043 = vsel %vm960, %v1042, %v1041
    %v1044 = vsub.s32 4, %v1020
    %v1045 = vsel %vm960, %v1044, %v1020
    %v1046 = vsel %vm959, %v122, %v1043
    %v1047 = vsel %vm959, 0, %v1045
    %v1048 = vcosq.f32.pop %v1046
    %v1049 = vsinq.f32.pop %v1046
    %vm1050 = vweird.f32 %v122
    %v1051 = vadd.s32 %v1047, 3
    %v1052 = vand.u32 %v1051, 3
    %vm1053 = vcmp.lt.s32.totalorder %v1052, 2
    %vm1054 = vcmp.eq.s32.totalorder %v1052, 0
    %v1055 = vxor.u32 %v1049, 2147483648
    %v1056 = vsel %vm1054, %v1048, %v1055
    %vm1057 = vcmp.eq.s32.totalorder %v1052, 2
    %v1058 = vxor.u32 %v1048, 2147483648
    %v1059 = vsel %vm1057, %v1058, %v1049
    %v1060 = vsel %vm1053, %v1056, %v1059
    %v1061 = vsel %vm1050, nan, %v1060
    %v1062 = vand.u32 2147483647, %v123
    %vm1063 = vcmp.le.f32.partialorder %v1062, 0.7853982
    %vm1064 = vcmp.lt.s32.totalorder %v123, 0
    %v1065 = vand.u32 %v123, 2139095040
    %v1066 = vshrl.u32 %v1065, 23
    %v1067 = vsub.s32 %v1066, 127
    %v1068 = vand.u32 2147483647, %v123
    %v1069 = vand.u32 %v1068, 8388607
    %v1070 = vor.u32 %v1069, 8388608
    %v1071 = vsub.s32 0, %v1070
    %v1072 = vadd.s32 %v1067, 1
    %vm1073 = vcmp.gt.s32.totalorder %v1072, 0
    %v1074 = vsel %vm1073, %v1072, 0
    %v1075 = vshrl.u32 %v1074, 5
    %v1076 = vand.u32 %v1074, 31
    %v1077 = vsub.s32 32, %v1076
    %v1078 = vshrl.u32 683565275, %v1077
    %v1079 = vshll.u32 683565275, %v1076
    %v1080 = vshrl.u32 2475754826, %v1077
    %v1081 = vor.u32 %v1079, %v1080
    %v1082 = vshll.u32 2475754826, %v1076
    %v1083 = vshrl.u32 2131351028, %v1077
    %v1084 = vor.u32 %v1082, %v1083
    %v1085 = vshll.u32 2131351028, %v1076
    %v1086 = vshrl.u32 2102212464, %v1077
    %v1087 = vor.u32 %v1085, %v1086
    %v1088 = vshll.u32 2102212464, %v1076
    %v1089 = vshrl.u32 920167782, %v1077
    %v1090 = vor.u32 %v1088, %v1089
    %v1091 = vshll.u32 920167782, %v1076
    %v1092 = vshrl.u32 1326507024, %v1077
    %v1093 = vor.u32 %v1091, %v1092
    %vm1094 = vcmp.lt.s32.totalorder %v1075, 1
    %vm1095 = vcmp.lt.s32.totalorder %v1075, 2
    %vm1096 = vcmp.lt.s32.totalorder %v1075, 3
    %vm1097 = vcmp.lt.s32.totalorder %v1075, 4
    %v1098 = vsel %vm1094, %v1078, %v1081
    %v1099 = vsel %vm1097, %v1087, 2102212464
    %v1100 = vsel %vm1096, %v1084, %v1099
    %v1101 = vsel %vm1095, %v1098, %v1100
    %v1102 = vsel %vm1094, %v1081, %v1084
    %v1103 = vsel %vm1097, %v1090, 920167782
    %v1104 = vsel %vm1096, %v1087, %v1103
    %v1105 = vsel %vm1095, %v1102, %v1104
    %v1106 = vsel %vm1094, %v1084, %v1087
    %v1107 = vsel %vm1097, %v1093, 1326507024
    %v1108 = vsel %vm1096, %v1090, %v1107
    %v1109 = vsel %vm1095, %v1106, %v1108
    %v1110 = vshll.u32 %v1070, 8
    %v1111 = vmul.u32.u64.compose %v1110, %v1109
    %v1112 = vextract.low.u32 %v1111
    %v1113 = vextract.high.u32 %v1111
    %v1114 = vmul.u32.u64.compose %v1110, %v1105
    %v1115 = vextract.low.u32 %v1114
    %v1116 = vextract.high.u32 %v1114
    %v1117 = vmul.u32 %v1110, %v1101
    %v1118 = vadd.s32 %v1113, %v1115
    %vm1119 = vc.u32 %v1113, %v1115
    %v1120 = vadd.s32 %v1116, 1
    %v1121 = vsel %vm1119, %v1120, %v1116
    %v1122 = vadd.s32 %v1117, %v1121
    %v1123 = vadd.s32 %v1122, 536870912
    %v1124 = vshrl.u32 %v1123, 30
    %v1125 = vshll.u32 %v1124, 30
    %v1126 = vsub.s32 %v1122, %v1125
    %vm1127 = vcmp.lt.s32.totalorder %v1126, 0
    %v1128 = vsub.s32 0, %v1126
    %v1129 = vsel %vm1127, %v1128, %v1126
    %v1130 = vclz %v1129
    %v1131 = vsub.s32 %v1130, 2
    %vm1132 = vcmp.gt.s32.totalorder 0, %v1131
    %v1133 = vsel %vm1132, 0, %v1131
    %v1134 = vsub.s32 32, %v1133
    %v1135 = vshll.u32 %v1126, %v1133
    %v1136 = vshrl.u32 %v1118, %v1134
    %v1137 = vor.u32 %v1135, %v1136
    %v1138 = vsub.s32 4294967266, %v1133
    %v1139 = vadd.s32 %v1138, 127
    %v1140 = vshll.u32 %v1139, 23
    %v1141 = vor.u32 4788187, %v1140
    %v1142 = vand.u32 2147483647, %v1141
    %v1144 = vcvt.s32.f32 %v1137
    %v1145 = vmul.f32 %v1144, %v1142
    %v1146 = vxor.u32 %v1145, 2147483648
    %v1147 = vsel %vm1064, %v1146, %v1145
    %v1148 = vsub.s32 4, %v1124
    %v1149 = vsel %vm1064, %v1148, %v1124
    %v1150 = vsel %vm1063, %v123, %v1147
    %v1151 = vsel %vm1063, 0, %v1149
    %v1152 = vcosq.f32.pop %v1150
    %v1153 = vsinq.f32.pop %v1150
    %vm1154 = vweird.f32 %v123
    %v1155 = vadd.s32 %v1151, 3
    %v1156 = vand.u32 %v1155, 3
    %vm1157 = vcmp.lt.s32.totalorder %v1156, 2
    %vm1158 = vcmp.eq.s32.totalorder %v1156, 0
    %v1159 = vxor.u32 %v1153, 2147483648
    %v1160 = vsel %vm1158, %v1152, %v1159
    %vm1161 = vcmp.eq.s32.totalorder %v1156, 2
    %v1162 = vxor.u32 %v1152, 2147483648
    %v1163 = vsel %vm1161, %v1162, %v1153
    %v1164 = vsel %vm1157, %v1160, %v1163
    %v1165 = vsel %vm1154, nan, %v1164
    %v1166 = vand.u32 2147483647, %v124
    %vm1167 = vcmp.le.f32.partialorder %v1166, 0.7853982
    %vm1168 = vcmp.lt.s32.totalorder %v124, 0
    %v1169 = vand.u32 %v124, 2139095040
    %v1170 = vshrl.u32 %v1169, 23
    %v1171 = vsub.s32 %v1170, 127
    %v1172 = vand.u32 2147483647, %v124
    %v1173 = vand.u32 %v1172, 8388607
    %v1174 = vor.u32 %v1173, 8388608
    %v1175 = vsub.s32 0, %v1174
    %v1176 = vadd.s32 %v1171, 1
    %vm1177 = vcmp.gt.s32.totalorder %v1176, 0
    %v1178 = vsel %vm1177, %v1176, 0
    %v1179 = vshrl.u32 %v1178, 5
    %v1180 = vand.u32 %v1178, 31
    %v1181 = vsub.s32 32, %v1180
    %v1182 = vshrl.u32 683565275, %v1181
    %v1183 = vshll.u32 683565275, %v1180
    %v1184 = vshrl.u32 2475754826, %v1181
    %v1185 = vor.u32 %v1183, %v1184
    %v1186 = vshll.u32 2475754826, %v1180
    %v1187 = vshrl.u32 2131351028, %v1181
    %v1188 = vor.u32 %v1186, %v1187
    %v1189 = vshll.u32 2131351028, %v1180
    %v1190 = vshrl.u32 2102212464, %v1181
    %v1191 = vor.u32 %v1189, %v1190
    %v1192 = vshll.u32 2102212464, %v1180
    %v1193 = vshrl.u32 920167782, %v1181
    %v1194 = vor.u32 %v1192, %v1193
    %v1195 = vshll.u32 920167782, %v1180
    %v1196 = vshrl.u32 1326507024, %v1181
    %v1197 = vor.u32 %v1195, %v1196
    %vm1198 = vcmp.lt.s32.totalorder %v1179, 1
    %vm1199 = vcmp.lt.s32.totalorder %v1179, 2
    %vm1200 = vcmp.lt.s32.totalorder %v1179, 3
    %vm1201 = vcmp.lt.s32.totalorder %v1179, 4
    %v1202 = vsel %vm1198, %v1182, %v1185
    %v1203 = vsel %vm1201, %v1191, 2102212464
    %v1204 = vsel %vm1200, %v1188, %v1203
    %v1205 = vsel %vm1199, %v1202, %v1204
    %v1206 = vsel %vm1198, %v1185, %v1188
    %v1207 = vsel %vm1201, %v1194, 920167782
    %v1208 = vsel %vm1200, %v1191, %v1207
    %v1209 = vsel %vm1199, %v1206, %v1208
    %v1210 = vsel %vm1198, %v1188, %v1191
    %v1211 = vsel %vm1201, %v1197, 1326507024
    %v1212 = vsel %vm1200, %v1194, %v1211
    %v1213 = vsel %vm1199, %v1210, %v1212
    %v1214 = vshll.u32 %v1174, 8
    %v1215 = vmul.u32.u64.compose %v1214, %v1213
    %v1216 = vextract.low.u32 %v1215
    %v1217 = vextract.high.u32 %v1215
    %v1218 = vmul.u32.u64.compose %v1214, %v1209
    %v1219 = vextract.low.u32 %v1218
    %v1220 = vextract.high.u32 %v1218
    %v1221 = vmul.u32 %v1214, %v1205
    %v1222 = vadd.s32 %v1217, %v1219
    %vm1223 = vc.u32 %v1217, %v1219
    %v1224 = vadd.s32 %v1220, 1
    %v1225 = vsel %vm1223, %v1224, %v1220
    %v1226 = vadd.s32 %v1221, %v1225
    %v1227 = vadd.s32 %v1226, 536870912
    %v1228 = vshrl.u32 %v1227, 30
    %v1229 = vshll.u32 %v1228, 30
    %v1230 = vsub.s32 %v1226, %v1229
    %vm1231 = vcmp.lt.s32.totalorder %v1230, 0
    %v1232 = vsub.s32 0, %v1230
    %v1233 = vsel %vm1231, %v1232, %v1230
    %v1234 = vclz %v1233
    %v1235 = vsub.s32 %v1234, 2
    %vm1236 = vcmp.gt.s32.totalorder 0, %v1235
    %v1237 = vsel %vm1236, 0, %v1235
    %v1238 = vsub.s32 32, %v1237
    %v1239 = vshll.u32 %v1230, %v1237
    %v1240 = vshrl.u32 %v1222, %v1238
    %v1241 = vor.u32 %v1239, %v1240
    %v1242 = vsub.s32 4294967266, %v1237
    %v1243 = vadd.s32 %v1242, 127
    %v1244 = vshll.u32 %v1243, 23
    %v1245 = vor.u32 4788187, %v1244
    %v1246 = vand.u32 2147483647, %v1245
    %v1248 = vcvt.s32.f32 %v1241
    %v1249 = vmul.f32 %v1248, %v1246
    %v1250 = vxor.u32 %v1249, 2147483648
    %v1251 = vsel %vm1168, %v1250, %v1249
    %v1252 = vsub.s32 4, %v1228
    %v1253 = vsel %vm1168, %v1252, %v1228
    %v1254 = vsel %vm1167, %v124, %v1251
    %v1255 = vsel %vm1167, 0, %v1253
    %v1256 = vcosq.f32.pop %v1254
    %v1257 = vsinq.f32.pop %v1254
    %vm1258 = vweird.f32 %v124
    %v1259 = vadd.s32 %v1255, 3
    %v1260 = vand.u32 %v1259, 3
    %vm1261 = vcmp.lt.s32.totalorder %v1260, 2
    %vm1262 = vcmp.eq.s32.totalorder %v1260, 0
    %v1263 = vxor.u32 %v1257, 2147483648
    %v1264 = vsel %vm1262, %v1256, %v1263
    %vm1265 = vcmp.eq.s32.totalorder %v1260, 2
    %v1266 = vxor.u32 %v1256, 2147483648
    %v1267 = vsel %vm1265, %v1266, %v1257
    %v1268 = vsel %vm1261, %v1264, %v1267
    %v1269 = vsel %vm1258, nan, %v1268
    %v1270 = vand.u32 2147483647, %v125
    %vm1271 = vcmp.le.f32.partialorder %v1270, 0.7853982
    %vm1272 = vcmp.lt.s32.totalorder %v125, 0
    %v1273 = vand.u32 %v125, 2139095040
    %v1274 = vshrl.u32 %v1273, 23
    %v1275 = vsub.s32 %v1274, 127
    %v1276 = vand.u32 2147483647, %v125
    %v1277 = vand.u32 %v1276, 8388607
    %v1278 = vor.u32 %v1277, 8388608
    %v1279 = vsub.s32 0, %v1278
    %v1280 = vadd.s32 %v1275, 1
    %vm1281 = vcmp.gt.s32.totalorder %v1280, 0
    %v1282 = vsel %vm1281, %v1280, 0
    %v1283 = vshrl.u32 %v1282, 5
    %v1284 = vand.u32 %v1282, 31
    %v1285 = vsub.s32 32, %v1284
    %v1286 = vshrl.u32 683565275, %v1285
    %v1287 = vshll.u32 683565275, %v1284
    %v1288 = vshrl.u32 2475754826, %v1285
    %v1289 = vor.u32 %v1287, %v1288
    %v1290 = vshll.u32 2475754826, %v1284
    %v1291 = vshrl.u32 2131351028, %v1285
    %v1292 = vor.u32 %v1290, %v1291
    %v1293 = vshll.u32 2131351028, %v1284
    %v1294 = vshrl.u32 2102212464, %v1285
    %v1295 = vor.u32 %v1293, %v1294
    %v1296 = vshll.u32 2102212464, %v1284
    %v1297 = vshrl.u32 920167782, %v1285
    %v1298 = vor.u32 %v1296, %v1297
    %v1299 = vshll.u32 920167782, %v1284
    %v1300 = vshrl.u32 1326507024, %v1285
    %v1301 = vor.u32 %v1299, %v1300
    %vm1302 = vcmp.lt.s32.totalorder %v1283, 1
    %vm1303 = vcmp.lt.s32.totalorder %v1283, 2
    %vm1304 = vcmp.lt.s32.totalorder %v1283, 3
    %vm1305 = vcmp.lt.s32.totalorder %v1283, 4
    %v1306 = vsel %vm1302, %v1286, %v1289
    %v1307 = vsel %vm1305, %v1295, 2102212464
    %v1308 = vsel %vm1304, %v1292, %v1307
    %v1309 = vsel %vm1303, %v1306, %v1308
    %v1310 = vsel %vm1302, %v1289, %v1292
    %v1311 = vsel %vm1305, %v1298, 920167782
    %v1312 = vsel %vm1304, %v1295, %v1311
    %v1313 = vsel %vm1303, %v1310, %v1312
    %v1314 = vsel %vm1302, %v1292, %v1295
    %v1315 = vsel %vm1305, %v1301, 1326507024
    %v1316 = vsel %vm1304, %v1298, %v1315
    %v1317 = vsel %vm1303, %v1314, %v1316
    %v1318 = vshll.u32 %v1278, 8
    %v1319 = vmul.u32.u64.compose %v1318, %v1317
    %v1320 = vextract.low.u32 %v1319
    %v1321 = vextract.high.u32 %v1319
    %v1322 = vmul.u32.u64.compose %v1318, %v1313
    %v1323 = vextract.low.u32 %v1322
    %v1324 = vextract.high.u32 %v1322
    %v1325 = vmul.u32 %v1318, %v1309
    %v1326 = vadd.s32 %v1321, %v1323
    %vm1327 = vc.u32 %v1321, %v1323
    %v1328 = vadd.s32 %v1324, 1
    %v1329 = vsel %vm1327, %v1328, %v1324
    %v1330 = vadd.s32 %v1325, %v1329
    %v1331 = vadd.s32 %v1330, 536870912
    %v1332 = vshrl.u32 %v1331, 30
    %v1333 = vshll.u32 %v1332, 30
    %v1334 = vsub.s32 %v1330, %v1333
    %vm1335 = vcmp.lt.s32.totalorder %v1334, 0
    %v1336 = vsub.s32 0, %v1334
    %v1337 = vsel %vm1335, %v1336, %v1334
    %v1338 = vclz %v1337
    %v1339 = vsub.s32 %v1338, 2
    %vm1340 = vcmp.gt.s32.totalorder 0, %v1339
    %v1341 = vsel %vm1340, 0, %v1339
    %v1342 = vsub.s32 32, %v1341
    %v1343 = vshll.u32 %v1334, %v1341
    %v1344 = vshrl.u32 %v1326, %v1342
    %v1345 = vor.u32 %v1343, %v1344
    %v1346 = vsub.s32 4294967266, %v1341
    %v1347 = vadd.s32 %v1346, 127
    %v1348 = vshll.u32 %v1347, 23
    %v1349 = vor.u32 4788187, %v1348
    %v1350 = vand.u32 2147483647, %v1349
    %v1352 = vcvt.s32.f32 %v1345
    %v1353 = vmul.f32 %v1352, %v1350
    %v1354 = vxor.u32 %v1353, 2147483648
    %v1355 = vsel %vm1272, %v1354, %v1353
    %v1356 = vsub.s32 4, %v1332
    %v1357 = vsel %vm1272, %v1356, %v1332
    %v1358 = vsel %vm1271, %v125, %v1355
    %v1359 = vsel %vm1271, 0, %v1357
    %v1360 = vcosq.f32.pop %v1358
    %v1361 = vsinq.f32.pop %v1358
    %vm1362 = vweird.f32 %v125
    %v1363 = vadd.s32 %v1359, 3
    %v1364 = vand.u32 %v1363, 3
    %vm1365 = vcmp.lt.s32.totalorder %v1364, 2
    %vm1366 = vcmp.eq.s32.totalorder %v1364, 0
    %v1367 = vxor.u32 %v1361, 2147483648
    %v1368 = vsel %vm1366, %v1360, %v1367
    %vm1369 = vcmp.eq.s32.totalorder %v1364, 2
    %v1370 = vxor.u32 %v1360, 2147483648
    %v1371 = vsel %vm1369, %v1370, %v1361
    %v1372 = vsel %vm1365, %v1368, %v1371
    %v1373 = vsel %vm1362, nan, %v1372
    %v1374 = vld [vmem:[%s2] sm:$0xf]
    %v1375 = vld [vmem:[%s2 + $0x4] sm:$0xf]
    %v1376 = vld [vmem:[%s2 + $0x8] sm:$0xf]
    %v1377 = vld [vmem:[%s2 + $0xc] sm:$0xf]
    %v1378 = vld [vmem:[%s2 + $0x10] sm:$0xf]
    %v1379 = vld [vmem:[%s2 + $0x14] sm:$0xf]
    %v1380 = vld [vmem:[%s2 + $0x18] sm:$0xf]
    %v1381 = vld [vmem:[%s2 + $0x1c] sm:$0xf]
    %v1382 = vld [vmem:[%s2 + $0x20] sm:$0xf]
    %v1383 = vld [vmem:[%s2 + $0x24] sm:$0xf]
    %v1384 = vld [vmem:[%s2 + $0x28] sm:$0xf]
    %v1385 = vld [vmem:[%s2 + $0x2c] sm:$0xf]
    %v1386 = vld [vmem:[%s2 + $0x30] sm:$0xf]
    %v1387 = vld [vmem:[%s2 + $0x34] sm:$0xf]
    %v1388 = vld [vmem:[%s2 + $0x38] sm:$0xf]
    %v1389 = vld [vmem:[%s2 + $0x3c] sm:$0xf]
    %v1390 = vpack.c.bf16 %v31, %v31
    %v1391 = vpack.c.bf16 %v32, %v32
    %v1392 = vld [vmem:[%s3] sm:$0xf]
    %v1393 = vld [vmem:[%s3 + $0x4] sm:$0xf]
    %v1394 = vld [vmem:[%s3 + $0x8] sm:$0xf]
    %v1395 = vld [vmem:[%s3 + $0xc] sm:$0xf]
    %v1396 = vld [vmem:[%s3 + $0x10] sm:$0xf]
    %v1397 = vld [vmem:[%s3 + $0x14] sm:$0xf]
    %v1398 = vld [vmem:[%s3 + $0x18] sm:$0xf]
    %v1399 = vld [vmem:[%s3 + $0x1c] sm:$0xf]
    %v1400 = vld [vmem:[%s3 + $0x20] sm:$0xf]
    %v1401 = vld [vmem:[%s3 + $0x24] sm:$0xf]
    %v1402 = vld [vmem:[%s3 + $0x28] sm:$0xf]
    %v1403 = vld [vmem:[%s3 + $0x2c] sm:$0xf]
    %v1404 = vld [vmem:[%s3 + $0x30] sm:$0xf]
    %v1405 = vld [vmem:[%s3 + $0x34] sm:$0xf]
    %v1406 = vld [vmem:[%s3 + $0x38] sm:$0xf]
    %v1407 = vld [vmem:[%s3 + $0x3c] sm:$0xf]
    %v1408 = vpack.c.bf16 %v437, %v229
    %v1409 = vpack.c.bf16 %v541, %v333
    %v1410 = vpack.c.bf16 %v853, %v645
    %v1411 = vpack.c.bf16 %v957, %v749
    %v1412 = vpack.c.bf16 %v1269, %v1061
    %v1413 = vpack.c.bf16 %v1373, %v1165
    %v1430 = vunpack.c.l.b16 %v1392
    %v1431 = vunpack.c.l.b16 %v1393
    %v1432 = vunpack.c.l.b16 %v1394
    %v1433 = vunpack.c.l.b16 %v1395
    %v1434 = vunpack.c.l.b16 %v1396
    %v1435 = vunpack.c.l.b16 %v1397
    %v1436 = vunpack.c.l.b16 %v1398
    %v1437 = vunpack.c.l.b16 %v1399
    %v1438 = vunpack.c.l.b16 %v1400
    %v1439 = vunpack.c.l.b16 %v1401
    %v1440 = vunpack.c.l.b16 %v1402
    %v1441 = vunpack.c.l.b16 %v1403
    %v1442 = vunpack.c.l.b16 %v1404
    %v1443 = vunpack.c.l.b16 %v1405
    %v1444 = vunpack.c.l.b16 %v1406
    %v1445 = vunpack.c.l.b16 %v1407
    %v1446 = vpack.c.b16 %v1431, %v1430
    %v1447 = vpack.c.b16 %v1433, %v1432
    %v1448 = vpack.c.b16 %v1435, %v1434
    %v1449 = vpack.c.b16 %v1437, %v1436
    %v1450 = vpack.c.b16 %v1439, %v1438
    %v1451 = vpack.c.b16 %v1441, %v1440
    %v1452 = vpack.c.b16 %v1443, %v1442
    %v1453 = vpack.c.b16 %v1445, %v1444
    %vm1454 = vcmask 392192
    %v1456 = vsel %vm1454, %v1446, 0
    %v1459 = vsel %vm1454, %v1447, 0
    %v1462 = vsel %vm1454, %v1448, 0
    %v1465 = vsel %vm1454, %v1449, 0
    %v1468 = vsel %vm1454, %v1450, 0
    %v1471 = vsel %vm1454, %v1451, 0
    %v1474 = vsel %vm1454, %v1452, 0
    %v1477 = vsel %vm1454, %v1453, 0
    %1479 = vmatprep.subr.bf16.mxu0 0
    %1480 = vmatpush1.bf16.msra.mxu0 0
    %1481 = vmatprep.subr.bf16.mxu0 0
    %1482 = vmatpush1.bf16.msra.mxu0 0
    %1483 = vmatprep.subr.bf16.mxu0 0
    %1484 = vmatpush1.bf16.msra.mxu0 0
    %1485 = vmatprep.subr.bf16.mxu0 0
    %1486 = vmatpush1.bf16.msra.mxu0 0
    %1487 = vmatprep.subr.bf16.mxu0 0
    %1488 = vmatpush1.bf16.msra.mxu0 0
    %1489 = vmatprep.subr.bf16.mxu0 %v1413
    %1490 = vmatpush1.bf16.msra.mxu0 %v1412
    %1491 = vmatprep.subr.bf16.mxu0 %v1411
    %1492 = vmatpush1.bf16.msra.mxu0 %v1410
    %1493 = vmatprep.subr.bf16.mxu0 %v1409
    %1494 = vmatpush1.bf16.msra.mxu0 %v1408
    %1495 = vmatprep.subr.bf16.mxu0 0
    %1496 = vmatpush2.bf16.msra.mxu0 0
    %1497 = vmatprep.subr.bf16.mxu0 0
    %1498 = vmatpush2.bf16.msra.mxu0 0
    %1499 = vmatprep.subr.bf16.mxu0 0
    %1500 = vmatpush2.bf16.msra.mxu0 0
    %1501 = vmatprep.subr.bf16.mxu0 0
    %1502 = vmatpush2.bf16.msra.mxu0 0
    %1503 = vmatprep.subr.bf16.mxu0 0
    %1504 = vmatpush2.bf16.msra.mxu0 0
    %1505 = vmatprep.subr.bf16.mxu0 0
    %1506 = vmatpush2.bf16.msra.mxu0 0
    %1507 = vmatprep.subr.bf16.mxu0 0
    %1508 = vmatpush2.bf16.msra.mxu0 0
    %1509 = vmatprep.subr.bf16.mxu0 0
    %1510 = vmatpush2.bf16.msra.mxu0 0
    %1511 = vmatprep.mubr.bf16.mxu0 0
    %1512 = vmatmul.mubr.bf16.gmra.mxu0 %v1456
    %v1513 = vpop.f32.mrf.mxu0
    %v1514 = vadd.f32 0.0, %v1513
    %v1515 = vpop.f32.mrf.mxu0
    %v1516 = vadd.f32 0.0, %v1515
    %v1517 = vpop.f32.mrf.mxu0
    %v1518 = vadd.f32 0.0, %v1517
    %v1519 = vpop.f32.mrf.mxu0
    %v1520 = vadd.f32 0.0, %v1519
    %1521 = vmatprep.mubr.bf16.mxu0 0
    %1522 = vmatmul.mubr.bf16.gmra.mxu0 %v1459
    %v1523 = vpop.f32.mrf.mxu0
    %v1524 = vadd.f32 0.0, %v1523
    %v1525 = vpop.f32.mrf.mxu0
    %v1526 = vadd.f32 0.0, %v1525
    %v1527 = vpop.f32.mrf.mxu0
    %v1528 = vadd.f32 0.0, %v1527
    %v1529 = vpop.f32.mrf.mxu0
    %v1530 = vadd.f32 0.0, %v1529
    %1531 = vmatprep.mubr.bf16.mxu0 0
    %1532 = vmatmul.mubr.bf16.gmra.mxu0 %v1462
    %v1533 = vpop.f32.mrf.mxu0
    %v1534 = vadd.f32 0.0, %v1533
    %v1535 = vpop.f32.mrf.mxu0
    %v1536 = vadd.f32 0.0, %v1535
    %v1537 = vpop.f32.mrf.mxu0
    %v1538 = vadd.f32 0.0, %v1537
    %v1539 = vpop.f32.mrf.mxu0
    %v1540 = vadd.f32 0.0, %v1539
    %1541 = vmatprep.mubr.bf16.mxu0 0
    %1542 = vmatmul.mubr.bf16.gmra.mxu0 %v1465
    %v1543 = vpop.f32.mrf.mxu0
    %v1544 = vadd.f32 0.0, %v1543
    %v1545 = vpop.f32.mrf.mxu0
    %v1546 = vadd.f32 0.0, %v1545
    %v1547 = vpop.f32.mrf.mxu0
    %v1548 = vadd.f32 0.0, %v1547
    %v1549 = vpop.f32.mrf.mxu0
    %v1550 = vadd.f32 0.0, %v1549
    %1551 = vmatprep.mubr.bf16.mxu0 0
    %1552 = vmatmul.mubr.bf16.gmra.mxu0 %v1468
    %v1553 = vpop.f32.mrf.mxu0
    %v1554 = vadd.f32 0.0, %v1553
    %v1555 = vpop.f32.mrf.mxu0
    %v1556 = vadd.f32 0.0, %v1555
    %v1557 = vpop.f32.mrf.mxu0
    %v1558 = vadd.f32 0.0, %v1557
    %v1559 = vpop.f32.mrf.mxu0
    %v1560 = vadd.f32 0.0, %v1559
    %1561 = vmatprep.mubr.bf16.mxu0 0
    %1562 = vmatmul.mubr.bf16.gmra.mxu0 %v1471
    %v1563 = vpop.f32.mrf.mxu0
    %v1564 = vadd.f32 0.0, %v1563
    %v1565 = vpop.f32.mrf.mxu0
    %v1566 = vadd.f32 0.0, %v1565
    %v1567 = vpop.f32.mrf.mxu0
    %v1568 = vadd.f32 0.0, %v1567
    %v1569 = vpop.f32.mrf.mxu0
    %v1570 = vadd.f32 0.0, %v1569
    %1571 = vmatprep.mubr.bf16.mxu0 0
    %1572 = vmatmul.mubr.bf16.gmra.mxu0 %v1474
    %v1573 = vpop.f32.mrf.mxu0
    %v1574 = vadd.f32 0.0, %v1573
    %v1575 = vpop.f32.mrf.mxu0
    %v1576 = vadd.f32 0.0, %v1575
    %v1577 = vpop.f32.mrf.mxu0
    %v1578 = vadd.f32 0.0, %v1577
    %v1579 = vpop.f32.mrf.mxu0
    %v1580 = vadd.f32 0.0, %v1579
    %1581 = vmatprep.mubr.bf16.mxu0 0
    %1582 = vmatmul.mubr.bf16.gmra.mxu0 %v1477
    %v1583 = vpop.f32.mrf.mxu0
    %v1584 = vadd.f32 0.0, %v1583
    %v1585 = vpop.f32.mrf.mxu0
    %v1586 = vadd.f32 0.0, %v1585
    %v1587 = vpop.f32.mrf.mxu0
    %v1588 = vadd.f32 0.0, %v1587
    %v1589 = vpop.f32.mrf.mxu0
    %v1590 = vadd.f32 0.0, %v1589
    %1591 = vdwg.mxu0
    %v1608 = vunpack.c.l.b16 %v1374
    %v1609 = vunpack.c.l.b16 %v1375
    %v1610 = vunpack.c.l.b16 %v1376
    %v1611 = vunpack.c.l.b16 %v1377
    %v1612 = vunpack.c.l.b16 %v1378
    %v1613 = vunpack.c.l.b16 %v1379
    %v1614 = vunpack.c.l.b16 %v1380
    %v1615 = vunpack.c.l.b16 %v1381
    %v1616 = vunpack.c.l.b16 %v1382
    %v1617 = vunpack.c.l.b16 %v1383
    %v1618 = vunpack.c.l.b16 %v1384
    %v1619 = vunpack.c.l.b16 %v1385
    %v1620 = vunpack.c.l.b16 %v1386
    %v1621 = vunpack.c.l.b16 %v1387
    %v1622 = vunpack.c.l.b16 %v1388
    %v1623 = vunpack.c.l.b16 %v1389
    %v1624 = vpack.c.b16 %v1609, %v1608
    %v1625 = vpack.c.b16 %v1611, %v1610
    %v1626 = vpack.c.b16 %v1613, %v1612
    %v1627 = vpack.c.b16 %v1615, %v1614
    %v1628 = vpack.c.b16 %v1617, %v1616
    %v1629 = vpack.c.b16 %v1619, %v1618
    %v1630 = vpack.c.b16 %v1621, %v1620
    %v1631 = vpack.c.b16 %v1623, %v1622
    %vm1632 = vcmask 64512
    %v1634 = vsel %vm1632, %v1624, 0
    %v1637 = vsel %vm1632, %v1625, 0
    %v1640 = vsel %vm1632, %v1626, 0
    %v1643 = vsel %vm1632, %v1627, 0
    %v1646 = vsel %vm1632, %v1628, 0
    %v1649 = vsel %vm1632, %v1629, 0
    %v1652 = vsel %vm1632, %v1630, 0
    %v1655 = vsel %vm1632, %v1631, 0
    %v1658 = vsel %vm45, %v1390, 0
    %v1661 = vsel %vm45, %v1391, 0
    %1663 = vmatprep.subr.bf16.mxu0 0
    %1664 = vmatpush1.bf16.msra.mxu0 0
    %1665 = vmatprep.subr.bf16.mxu0 0
    %1666 = vmatpush1.bf16.msra.mxu0 0
    %1667 = vmatprep.subr.bf16.mxu0 0
    %1668 = vmatpush1.bf16.msra.mxu0 0
    %1669 = vmatprep.subr.bf16.mxu0 0
    %1670 = vmatpush1.bf16.msra.mxu0 0
    %1671 = vmatprep.subr.bf16.mxu0 0
    %1672 = vmatpush1.bf16.msra.mxu0 0
    %1673 = vmatprep.subr.bf16.mxu0 0
    %1674 = vmatpush1.bf16.msra.mxu0 0
    %1675 = vmatprep.subr.bf16.mxu0 0
    %1676 = vmatpush1.bf16.msra.mxu0 0
    %1677 = vmatprep.subr.bf16.mxu0 %v1661
    %1678 = vmatpush1.bf16.msra.mxu0 %v1658
    %1679 = vmatprep.subr.bf16.mxu0 0
    %1680 = vmatpush2.bf16.msra.mxu0 0
    %1681 = vmatprep.subr.bf16.mxu0 0
    %1682 = vmatpush2.bf16.msra.mxu0 0
    %1683 = vmatprep.subr.bf16.mxu0 0
    %1684 = vmatpush2.bf16.msra.mxu0 0
    %1685 = vmatprep.subr.bf16.mxu0 0
    %1686 = vmatpush2.bf16.msra.mxu0 0
    %1687 = vmatprep.subr.bf16.mxu0 0
    %1688 = vmatpush2.bf16.msra.mxu0 0
    %1689 = vmatprep.subr.bf16.mxu0 0
    %1690 = vmatpush2.bf16.msra.mxu0 0
    %1691 = vmatprep.subr.bf16.mxu0 0
    %1692 = vmatpush2.bf16.msra.mxu0 0
    %1693 = vmatprep.subr.bf16.mxu0 0
    %1694 = vmatpush2.bf16.msra.mxu0 0
    %1695 = vmatprep.mubr.bf16.mxu0 0
    %1696 = vmatmul.mubr.bf16.gmra.mxu0 %v1634
    %v1697 = vpop.f32.mrf.mxu0
    %v1698 = vadd.f32 %v1514, %v1697
    %v1699 = vpop.f32.mrf.mxu0
    %v1700 = vadd.f32 %v1516, %v1699
    %v1701 = vpop.f32.mrf.mxu0
    %v1702 = vadd.f32 %v1518, %v1701
    %v1703 = vpop.f32.mrf.mxu0
    %v1704 = vadd.f32 %v1520, %v1703
    %1705 = vmatprep.mubr.bf16.mxu0 0
    %1706 = vmatmul.mubr.bf16.gmra.mxu0 %v1637
    %v1707 = vpop.f32.mrf.mxu0
    %v1708 = vadd.f32 %v1524, %v1707
    %v1709 = vpop.f32.mrf.mxu0
    %v1710 = vadd.f32 %v1526, %v1709
    %v1711 = vpop.f32.mrf.mxu0
    %v1712 = vadd.f32 %v1528, %v1711
    %v1713 = vpop.f32.mrf.mxu0
    %v1714 = vadd.f32 %v1530, %v1713
    %1715 = vmatprep.mubr.bf16.mxu0 0
    %1716 = vmatmul.mubr.bf16.gmra.mxu0 %v1640
    %v1717 = vpop.f32.mrf.mxu0
    %v1718 = vadd.f32 %v1534, %v1717
    %v1719 = vpop.f32.mrf.mxu0
    %v1720 = vadd.f32 %v1536, %v1719
    %v1721 = vpop.f32.mrf.mxu0
    %v1722 = vadd.f32 %v1538, %v1721
    %v1723 = vpop.f32.mrf.mxu0
    %v1724 = vadd.f32 %v1540, %v1723
    %1725 = vmatprep.mubr.bf16.mxu0 0
    %1726 = vmatmul.mubr.bf16.gmra.mxu0 %v1643
    %v1727 = vpop.f32.mrf.mxu0
    %v1728 = vadd.f32 %v1544, %v1727
    %v1729 = vpop.f32.mrf.mxu0
    %v1730 = vadd.f32 %v1546, %v1729
    %v1731 = vpop.f32.mrf.mxu0
    %v1732 = vadd.f32 %v1548, %v1731
    %v1733 = vpop.f32.mrf.mxu0
    %v1734 = vadd.f32 %v1550, %v1733
    %1735 = vmatprep.mubr.bf16.mxu0 0
    %1736 = vmatmul.mubr.bf16.gmra.mxu0 %v1646
    %v1737 = vpop.f32.mrf.mxu0
    %v1738 = vadd.f32 %v1554, %v1737
    %v1739 = vpop.f32.mrf.mxu0
    %v1740 = vadd.f32 %v1556, %v1739
    %v1741 = vpop.f32.mrf.mxu0
    %v1742 = vadd.f32 %v1558, %v1741
    %v1743 = vpop.f32.mrf.mxu0
    %v1744 = vadd.f32 %v1560, %v1743
    %1745 = vmatprep.mubr.bf16.mxu0 0
    %1746 = vmatmul.mubr.bf16.gmra.mxu0 %v1649
    %v1747 = vpop.f32.mrf.mxu0
    %v1748 = vadd.f32 %v1564, %v1747
    %v1749 = vpop.f32.mrf.mxu0
    %v1750 = vadd.f32 %v1566, %v1749
    %v1751 = vpop.f32.mrf.mxu0
    %v1752 = vadd.f32 %v1568, %v1751
    %v1753 = vpop.f32.mrf.mxu0
    %v1754 = vadd.f32 %v1570, %v1753
    %1755 = vmatprep.mubr.bf16.mxu0 0
    %1756 = vmatmul.mubr.bf16.gmra.mxu0 %v1652
    %v1757 = vpop.f32.mrf.mxu0
    %v1758 = vadd.f32 %v1574, %v1757
    %v1759 = vpop.f32.mrf.mxu0
    %v1760 = vadd.f32 %v1576, %v1759
    %v1761 = vpop.f32.mrf.mxu0
    %v1762 = vadd.f32 %v1578, %v1761
    %v1763 = vpop.f32.mrf.mxu0
    %v1764 = vadd.f32 %v1580, %v1763
    %1765 = vmatprep.mubr.bf16.mxu0 0
    %1766 = vmatmul.mubr.bf16.gmra.mxu0 %v1655
    %v1767 = vpop.f32.mrf.mxu0
    %v1768 = vadd.f32 %v1584, %v1767
    %v1769 = vpop.f32.mrf.mxu0
    %v1770 = vadd.f32 %v1586, %v1769
    %v1771 = vpop.f32.mrf.mxu0
    %v1772 = vadd.f32 %v1588, %v1771
    %v1773 = vpop.f32.mrf.mxu0
    %v1774 = vadd.f32 %v1590, %v1773
    %1775 = vdwg.mxu0
    %v1776 = vmax.f32 %v1698, 0.0
    %v1777 = vmax.f32 %v1700, 0.0
    %v1778 = vmax.f32 %v1702, 0.0
    %v1779 = vmax.f32 %v1704, 0.0
    %v1780 = vmax.f32 %v1708, 0.0
    %v1781 = vmax.f32 %v1710, 0.0
    %v1782 = vmax.f32 %v1712, 0.0
    %v1783 = vmax.f32 %v1714, 0.0
    %v1784 = vmax.f32 %v1718, 0.0
    %v1785 = vmax.f32 %v1720, 0.0
    %v1786 = vmax.f32 %v1722, 0.0
    %v1787 = vmax.f32 %v1724, 0.0
    %v1788 = vmax.f32 %v1728, 0.0
    %v1789 = vmax.f32 %v1730, 0.0
    %v1790 = vmax.f32 %v1732, 0.0
    %v1791 = vmax.f32 %v1734, 0.0
    %v1792 = vmax.f32 %v1738, 0.0
    %v1793 = vmax.f32 %v1740, 0.0
    %v1794 = vmax.f32 %v1742, 0.0
    %v1795 = vmax.f32 %v1744, 0.0
    %v1796 = vmax.f32 %v1748, 0.0
    %v1797 = vmax.f32 %v1750, 0.0
    %v1798 = vmax.f32 %v1752, 0.0
    %v1799 = vmax.f32 %v1754, 0.0
    %v1800 = vmax.f32 %v1758, 0.0
    %v1801 = vmax.f32 %v1760, 0.0
    %v1802 = vmax.f32 %v1762, 0.0
    %v1803 = vmax.f32 %v1764, 0.0
    %v1804 = vmax.f32 %v1768, 0.0
    %v1805 = vmax.f32 %v1770, 0.0
    %v1806 = vmax.f32 %v1772, 0.0
    %v1807 = vmax.f32 %v1774, 0.0
    %v1808 = vpack.c.bf16 %v1778, %v1776
    %v1809 = vpack.c.bf16 %v1779, %v1777
    %v1810 = vpack.c.bf16 %v1782, %v1780
    %v1811 = vpack.c.bf16 %v1783, %v1781
    %v1812 = vpack.c.bf16 %v1786, %v1784
    %v1813 = vpack.c.bf16 %v1787, %v1785
    %v1814 = vpack.c.bf16 %v1790, %v1788
    %v1815 = vpack.c.bf16 %v1791, %v1789
    %v1816 = vpack.c.bf16 %v1794, %v1792
    %v1817 = vpack.c.bf16 %v1795, %v1793
    %v1818 = vpack.c.bf16 %v1798, %v1796
    %v1819 = vpack.c.bf16 %v1799, %v1797
    %v1820 = vpack.c.bf16 %v1802, %v1800
    %v1821 = vpack.c.bf16 %v1803, %v1801
    %v1822 = vpack.c.bf16 %v1806, %v1804
    %v1823 = vpack.c.bf16 %v1807, %v1805
    %v1824 = vld [vmem:[%s4] sm:$0xf]
    %v1825 = vld [vmem:[%s4 + $0x4] sm:$0xf]
    %v1826 = vld [vmem:[%s4 + $0x8] sm:$0xf]
    %v1827 = vld [vmem:[%s4 + $0xc] sm:$0xf]
    %v1828 = vld [vmem:[%s4 + $0x10] sm:$0xf]
    %v1829 = vld [vmem:[%s4 + $0x14] sm:$0xf]
    %v1830 = vld [vmem:[%s4 + $0x18] sm:$0xf]
    %v1831 = vld [vmem:[%s4 + $0x1c] sm:$0xf]
    %v1832 = vld [vmem:[%s4 + $0x20] sm:$0xf]
    %v1833 = vld [vmem:[%s4 + $0x24] sm:$0xf]
    %v1834 = vld [vmem:[%s4 + $0x28] sm:$0xf]
    %v1835 = vld [vmem:[%s4 + $0x2c] sm:$0xf]
    %v1836 = vld [vmem:[%s4 + $0x30] sm:$0xf]
    %v1837 = vld [vmem:[%s4 + $0x34] sm:$0xf]
    %v1838 = vld [vmem:[%s4 + $0x38] sm:$0xf]
    %v1839 = vld [vmem:[%s4 + $0x3c] sm:$0xf]
    %v1840 = vld [vmem:[%s5] sm:$0xff]
    %v1841 = vld [vmem:[%s5 + $0x8] sm:$0xff]
    %v1842 = vld [vmem:[%s5 + $0x10] sm:$0xff]
    %v1843 = vld [vmem:[%s5 + $0x18] sm:$0xff]
    %v1844 = vld [vmem:[%s5 + $0x20] sm:$0xff]
    %v1845 = vld [vmem:[%s5 + $0x28] sm:$0xff]
    %v1846 = vld [vmem:[%s5 + $0x30] sm:$0xff]
    %v1847 = vld [vmem:[%s5 + $0x38] sm:$0xff]
    %v1848 = vld [vmem:[%s5 + $0x40] sm:$0xff]
    %v1849 = vld [vmem:[%s5 + $0x48] sm:$0xff]
    %v1850 = vld [vmem:[%s5 + $0x50] sm:$0xff]
    %v1851 = vld [vmem:[%s5 + $0x58] sm:$0xff]
    %v1852 = vld [vmem:[%s5 + $0x60] sm:$0xff]
    %v1853 = vld [vmem:[%s5 + $0x68] sm:$0xff]
    %v1854 = vld [vmem:[%s5 + $0x70] sm:$0xff]
    %v1855 = vld [vmem:[%s5 + $0x78] sm:$0xff]
    %1857 = vset.pattern.permute.xlu0 0
    %1858 = vperm.xlu0 %1857, %v1840
    %v1859 = vpop.permute.xlu0 %1858
    %1862 = vset.pattern.permute.xlu0 0
    %1863 = vperm.xlu0 %1862, %v1841
    %v1864 = vpop.permute.xlu0 %1863
    %1867 = vset.pattern.permute.xlu0 0
    %1868 = vperm.xlu0 %1867, %v1842
    %v1869 = vpop.permute.xlu0 %1868
    %1872 = vset.pattern.permute.xlu0 0
    %1873 = vperm.xlu0 %1872, %v1843
    %v1874 = vpop.permute.xlu0 %1873
    %1877 = vset.pattern.permute.xlu0 0
    %1878 = vperm.xlu0 %1877, %v1844
    %v1879 = vpop.permute.xlu0 %1878
    %1882 = vset.pattern.permute.xlu0 0
    %1883 = vperm.xlu0 %1882, %v1845
    %v1884 = vpop.permute.xlu0 %1883
    %1887 = vset.pattern.permute.xlu0 0
    %1888 = vperm.xlu0 %1887, %v1846
    %v1889 = vpop.permute.xlu0 %1888
    %1892 = vset.pattern.permute.xlu0 0
    %1893 = vperm.xlu0 %1892, %v1847
    %v1894 = vpop.permute.xlu0 %1893
    %1897 = vset.pattern.permute.xlu0 0
    %1898 = vperm.xlu0 %1897, %v1848
    %v1899 = vpop.permute.xlu0 %1898
    %1902 = vset.pattern.permute.xlu0 0
    %1903 = vperm.xlu0 %1902, %v1849
    %v1904 = vpop.permute.xlu0 %1903
    %1907 = vset.pattern.permute.xlu0 0
    %1908 = vperm.xlu0 %1907, %v1850
    %v1909 = vpop.permute.xlu0 %1908
    %1912 = vset.pattern.permute.xlu0 0
    %1913 = vperm.xlu0 %1912, %v1851
    %v1914 = vpop.permute.xlu0 %1913
    %1917 = vset.pattern.permute.xlu0 0
    %1918 = vperm.xlu0 %1917, %v1852
    %v1919 = vpop.permute.xlu0 %1918
    %1922 = vset.pattern.permute.xlu0 0
    %1923 = vperm.xlu0 %1922, %v1853
    %v1924 = vpop.permute.xlu0 %1923
    %1927 = vset.pattern.permute.xlu0 0
    %1928 = vperm.xlu0 %1927, %v1854
    %v1929 = vpop.permute.xlu0 %1928
    %1932 = vset.pattern.permute.xlu0 0
    %1933 = vperm.xlu0 %1932, %v1855
    %v1934 = vpop.permute.xlu0 %1933
    %v1952 = vunpack.c.l.b16 %v1824
    %v1953 = vunpack.c.l.b16 %v1825
    %v1954 = vunpack.c.l.b16 %v1826
    %v1955 = vunpack.c.l.b16 %v1827
    %v1956 = vunpack.c.l.b16 %v1828
    %v1957 = vunpack.c.l.b16 %v1829
    %v1958 = vunpack.c.l.b16 %v1830
    %v1959 = vunpack.c.l.b16 %v1831
    %v1960 = vunpack.c.l.b16 %v1832
    %v1961 = vunpack.c.l.b16 %v1833
    %v1962 = vunpack.c.l.b16 %v1834
    %v1963 = vunpack.c.l.b16 %v1835
    %v1964 = vunpack.c.l.b16 %v1836
    %v1965 = vunpack.c.l.b16 %v1837
    %v1966 = vunpack.c.l.b16 %v1838
    %v1967 = vunpack.c.l.b16 %v1839
    %v1968 = vpack.c.b16 %v1953, %v1952
    %v1969 = vpack.c.b16 %v1955, %v1954
    %v1970 = vpack.c.b16 %v1957, %v1956
    %v1971 = vpack.c.b16 %v1959, %v1958
    %v1972 = vpack.c.b16 %v1961, %v1960
    %v1973 = vpack.c.b16 %v1963, %v1962
    %v1974 = vpack.c.b16 %v1965, %v1964
    %v1975 = vpack.c.b16 %v1967, %v1966
    %1984 = vmatprep.subr.bf16.mxu0 %v1823
    %1985 = vmatpush1.bf16.msra.mxu0 %v1822
    %1986 = vmatprep.subr.bf16.mxu0 %v1821
    %1987 = vmatpush1.bf16.msra.mxu0 %v1820
    %1988 = vmatprep.subr.bf16.mxu0 %v1819
    %1989 = vmatpush1.bf16.msra.mxu0 %v1818
    %1990 = vmatprep.subr.bf16.mxu0 %v1817
    %1991 = vmatpush1.bf16.msra.mxu0 %v1816
    %1992 = vmatprep.subr.bf16.mxu0 %v1815
    %1993 = vmatpush1.bf16.msra.mxu0 %v1814
    %1994 = vmatprep.subr.bf16.mxu0 %v1813
    %1995 = vmatpush1.bf16.msra.mxu0 %v1812
    %1996 = vmatprep.subr.bf16.mxu0 %v1811
    %1997 = vmatpush1.bf16.msra.mxu0 %v1810
    %1998 = vmatprep.subr.bf16.mxu0 %v1809
    %1999 = vmatpush1.bf16.msra.mxu0 %v1808
    %2000 = vmatprep.subr.bf16.mxu0 0
    %2001 = vmatpush2.bf16.msra.mxu0 0
    %2002 = vmatprep.subr.bf16.mxu0 0
    %2003 = vmatpush2.bf16.msra.mxu0 0
    %2004 = vmatprep.subr.bf16.mxu0 0
    %2005 = vmatpush2.bf16.msra.mxu0 0
    %2006 = vmatprep.subr.bf16.mxu0 0
    %2007 = vmatpush2.bf16.msra.mxu0 0
    %2008 = vmatprep.subr.bf16.mxu0 0
    %2009 = vmatpush2.bf16.msra.mxu0 0
    %2010 = vmatprep.subr.bf16.mxu0 0
    %2011 = vmatpush2.bf16.msra.mxu0 0
    %2012 = vmatprep.subr.bf16.mxu0 0
    %2013 = vmatpush2.bf16.msra.mxu0 0
    %2014 = vmatprep.subr.bf16.mxu0 0
    %2015 = vmatpush2.bf16.msra.mxu0 0
    %2016 = vmatprep.mubr.bf16.mxu0 0
    %2017 = vmatmul.mubr.bf16.gmra.mxu0 %v1968
    %v2018 = vpop.f32.mrf.mxu0
    %v2019 = vadd.f32 %v1859, %v2018
    %v2020 = vpop.f32.mrf.mxu0
    %v2021 = vadd.f32 %v1859, %v2020
    %v2022 = vpop.f32.mrf.mxu0
    %v2023 = vadd.f32 %v1864, %v2022
    %v2024 = vpop.f32.mrf.mxu0
    %v2025 = vadd.f32 %v1864, %v2024
    %2026 = vmatprep.mubr.bf16.mxu0 0
    %2027 = vmatmul.mubr.bf16.gmra.mxu0 %v1969
    %v2028 = vpop.f32.mrf.mxu0
    %v2029 = vadd.f32 %v1869, %v2028
    %v2030 = vpop.f32.mrf.mxu0
    %v2031 = vadd.f32 %v1869, %v2030
    %v2032 = vpop.f32.mrf.mxu0
    %v2033 = vadd.f32 %v1874, %v2032
    %v2034 = vpop.f32.mrf.mxu0
    %v2035 = vadd.f32 %v1874, %v2034
    %2036 = vmatprep.mubr.bf16.mxu0 0
    %2037 = vmatmul.mubr.bf16.gmra.mxu0 %v1970
    %v2038 = vpop.f32.mrf.mxu0
    %v2039 = vadd.f32 %v1879, %v2038
    %v2040 = vpop.f32.mrf.mxu0
    %v2041 = vadd.f32 %v1879, %v2040
    %v2042 = vpop.f32.mrf.mxu0
    %v2043 = vadd.f32 %v1884, %v2042
    %v2044 = vpop.f32.mrf.mxu0
    %v2045 = vadd.f32 %v1884, %v2044
    %2046 = vmatprep.mubr.bf16.mxu0 0
    %2047 = vmatmul.mubr.bf16.gmra.mxu0 %v1971
    %v2048 = vpop.f32.mrf.mxu0
    %v2049 = vadd.f32 %v1889, %v2048
    %v2050 = vpop.f32.mrf.mxu0
    %v2051 = vadd.f32 %v1889, %v2050
    %v2052 = vpop.f32.mrf.mxu0
    %v2053 = vadd.f32 %v1894, %v2052
    %v2054 = vpop.f32.mrf.mxu0
    %v2055 = vadd.f32 %v1894, %v2054
    %2056 = vmatprep.mubr.bf16.mxu0 0
    %2057 = vmatmul.mubr.bf16.gmra.mxu0 %v1972
    %v2058 = vpop.f32.mrf.mxu0
    %v2059 = vadd.f32 %v1899, %v2058
    %v2060 = vpop.f32.mrf.mxu0
    %v2061 = vadd.f32 %v1899, %v2060
    %v2062 = vpop.f32.mrf.mxu0
    %v2063 = vadd.f32 %v1904, %v2062
    %v2064 = vpop.f32.mrf.mxu0
    %v2065 = vadd.f32 %v1904, %v2064
    %2066 = vmatprep.mubr.bf16.mxu0 0
    %2067 = vmatmul.mubr.bf16.gmra.mxu0 %v1973
    %v2068 = vpop.f32.mrf.mxu0
    %v2069 = vadd.f32 %v1909, %v2068
    %v2070 = vpop.f32.mrf.mxu0
    %v2071 = vadd.f32 %v1909, %v2070
    %v2072 = vpop.f32.mrf.mxu0
    %v2073 = vadd.f32 %v1914, %v2072
    %v2074 = vpop.f32.mrf.mxu0
    %v2075 = vadd.f32 %v1914, %v2074
    %2076 = vmatprep.mubr.bf16.mxu0 0
    %2077 = vmatmul.mubr.bf16.gmra.mxu0 %v1974
    %v2078 = vpop.f32.mrf.mxu0
    %v2079 = vadd.f32 %v1919, %v2078
    %v2080 = vpop.f32.mrf.mxu0
    %v2081 = vadd.f32 %v1919, %v2080
    %v2082 = vpop.f32.mrf.mxu0
    %v2083 = vadd.f32 %v1924, %v2082
    %v2084 = vpop.f32.mrf.mxu0
    %v2085 = vadd.f32 %v1924, %v2084
    %2086 = vmatprep.mubr.bf16.mxu0 0
    %2087 = vmatmul.mubr.bf16.gmra.mxu0 %v1975
    %v2088 = vpop.f32.mrf.mxu0
    %v2089 = vadd.f32 %v1929, %v2088
    %v2090 = vpop.f32.mrf.mxu0
    %v2091 = vadd.f32 %v1929, %v2090
    %v2092 = vpop.f32.mrf.mxu0
    %v2093 = vadd.f32 %v1934, %v2092
    %v2094 = vpop.f32.mrf.mxu0
    %v2095 = vadd.f32 %v1934, %v2094
    %2096 = vdwg.mxu0
    %v2097 = vmax.f32 %v2019, 0.0
    %v2098 = vmax.f32 %v2021, 0.0
    %v2099 = vmax.f32 %v2023, 0.0
    %v2100 = vmax.f32 %v2025, 0.0
    %v2101 = vmax.f32 %v2029, 0.0
    %v2102 = vmax.f32 %v2031, 0.0
    %v2103 = vmax.f32 %v2033, 0.0
    %v2104 = vmax.f32 %v2035, 0.0
    %v2105 = vmax.f32 %v2039, 0.0
    %v2106 = vmax.f32 %v2041, 0.0
    %v2107 = vmax.f32 %v2043, 0.0
    %v2108 = vmax.f32 %v2045, 0.0
    %v2109 = vmax.f32 %v2049, 0.0
    %v2110 = vmax.f32 %v2051, 0.0
    %v2111 = vmax.f32 %v2053, 0.0
    %v2112 = vmax.f32 %v2055, 0.0
    %v2113 = vmax.f32 %v2059, 0.0
    %v2114 = vmax.f32 %v2061, 0.0
    %v2115 = vmax.f32 %v2063, 0.0
    %v2116 = vmax.f32 %v2065, 0.0
    %v2117 = vmax.f32 %v2069, 0.0
    %v2118 = vmax.f32 %v2071, 0.0
    %v2119 = vmax.f32 %v2073, 0.0
    %v2120 = vmax.f32 %v2075, 0.0
    %v2121 = vmax.f32 %v2079, 0.0
    %v2122 = vmax.f32 %v2081, 0.0
    %v2123 = vmax.f32 %v2083, 0.0
    %v2124 = vmax.f32 %v2085, 0.0
    %v2125 = vmax.f32 %v2089, 0.0
    %v2126 = vmax.f32 %v2091, 0.0
    %v2127 = vmax.f32 %v2093, 0.0
    %v2128 = vmax.f32 %v2095, 0.0
    %v2129 = vpack.c.bf16 %v2099, %v2097
    %v2130 = vpack.c.bf16 %v2100, %v2098
    %v2131 = vpack.c.bf16 %v2103, %v2101
    %v2132 = vpack.c.bf16 %v2104, %v2102
    %v2133 = vpack.c.bf16 %v2107, %v2105
    %v2134 = vpack.c.bf16 %v2108, %v2106
    %v2135 = vpack.c.bf16 %v2111, %v2109
    %v2136 = vpack.c.bf16 %v2112, %v2110
    %v2137 = vpack.c.bf16 %v2115, %v2113
    %v2138 = vpack.c.bf16 %v2116, %v2114
    %v2139 = vpack.c.bf16 %v2119, %v2117
    %v2140 = vpack.c.bf16 %v2120, %v2118
    %v2141 = vpack.c.bf16 %v2123, %v2121
    %v2142 = vpack.c.bf16 %v2124, %v2122
    %v2143 = vpack.c.bf16 %v2127, %v2125
    %v2144 = vpack.c.bf16 %v2128, %v2126
    %v2145 = vld [vmem:[%s6] sm:$0xf]
    %v2146 = vld [vmem:[%s7] sm:$0xff]
    %2148 = vset.pattern.permute.xlu0 0
    %2149 = vperm.xlu0 %2148, %v2146
    %v2150 = vpop.permute.xlu0 %2149
    %2152 = vmatprep.subr.bf16.mxu0 %v2144
    %2153 = vmatpush1.bf16.msra.mxu0 %v2143
    %2154 = vmatprep.subr.bf16.mxu0 %v2142
    %2155 = vmatpush1.bf16.msra.mxu0 %v2141
    %2156 = vmatprep.subr.bf16.mxu0 %v2140
    %2157 = vmatpush1.bf16.msra.mxu0 %v2139
    %2158 = vmatprep.subr.bf16.mxu0 %v2138
    %2159 = vmatpush1.bf16.msra.mxu0 %v2137
    %2160 = vmatprep.subr.bf16.mxu0 %v2136
    %2161 = vmatpush1.bf16.msra.mxu0 %v2135
    %2162 = vmatprep.subr.bf16.mxu0 %v2134
    %2163 = vmatpush1.bf16.msra.mxu0 %v2133
    %2164 = vmatprep.subr.bf16.mxu0 %v2132
    %2165 = vmatpush1.bf16.msra.mxu0 %v2131
    %2166 = vmatprep.subr.bf16.mxu0 %v2130
    %2167 = vmatpush1.bf16.msra.mxu0 %v2129
    %2168 = vmatprep.subr.bf16.mxu0 0
    %2169 = vmatpush2.bf16.msra.mxu0 0
    %2170 = vmatprep.subr.bf16.mxu0 0
    %2171 = vmatpush2.bf16.msra.mxu0 0
    %2172 = vmatprep.subr.bf16.mxu0 0
    %2173 = vmatpush2.bf16.msra.mxu0 0
    %2174 = vmatprep.subr.bf16.mxu0 0
    %2175 = vmatpush2.bf16.msra.mxu0 0
    %2176 = vmatprep.subr.bf16.mxu0 0
    %2177 = vmatpush2.bf16.msra.mxu0 0
    %2178 = vmatprep.subr.bf16.mxu0 0
    %2179 = vmatpush2.bf16.msra.mxu0 0
    %2180 = vmatprep.subr.bf16.mxu0 0
    %2181 = vmatpush2.bf16.msra.mxu0 0
    %2182 = vmatprep.subr.bf16.mxu0 0
    %2183 = vmatpush2.bf16.msra.mxu0 0
    %2184 = vmatprep.mubr.bf16.mxu0 0
    %2185 = vmatmul.mubr.bf16.gmra.mxu0 %v2145
    %v2186 = vpop.f32.mrf.mxu0
    %v2187 = vadd.f32 %v2150, %v2186
    %v2188 = vpop.f32.mrf.mxu0
    %v2189 = vadd.f32 %v2150, %v2188
    %v2190 = vpop.f32.mrf.mxu0
    %v2191 = vpop.f32.mrf.mxu0
    %2192 = vdwg.mxu0
    %v2193 = vmax.f32 %v2187, -60.0
    %v2194 = vmax.f32 %v2189, -60.0
    %v2195 = vsub.f32 0.0, %v2193
    %v2196 = vsub.f32 0.0, %v2194
    %v2197 = vmul.f32 %v2195, 1.442695
    %v2198 = vpow.pop %v2197
    %v2199 = vmul.f32 %v2196, 1.442695
    %v2200 = vpow.pop %v2199
    %2201 = vset.pattern.permute.xlu0 1
    %2202 = vperm.xlu0 %2201, %v2146
    %v2203 = vpop.permute.xlu0 %2202
    %v2205 = vadd.f32 %v2203, %v2198
    %v2206 = vadd.f32 %v2203, %v2200
    %v2207 = vrcp.pop %v2205
    %v2208 = vrcp.pop %v2206
    %2209 = vst [vmem:[#allocation2] sm:$0xff] %v2207
    %2210 = vst [vmem:[#allocation2 + $0x8] sm:$0xff] %v2208
    // Predicated region
    $region34: #{tpu_custom_call.1} parent=1 // pred_check
      _
    $region35: #{tpu_custom_call.1} parent=1 // pred_check_branch
      %2212 = sbr.rel (0) target = $region37
    $region36: #{tpu_custom_call.1} parent=1 // pred_region
      %s2214 = ssub.s32 256, 256
      %2215 = vsyncadd [#allocation3], %s2214
      %s2217 = sshll.u32 [#allocation2], 4
      %s2218 = int_to_ptr.vmem [resolvable:$true] %s2217
      %2220 = dma.vmem_to_hbm [thread:$0]  %s2218, 256, %s8, [#allocation3]
    $region37: #{tpu_custom_call.1} parent=1 // pred_fallthru
      _
    // Predicated region
    $region38: #{tpu_custom_call.1} parent=1 // pred_check
      _
    $region39: #{tpu_custom_call.1} parent=1 // pred_check_branch
      %2222 = sbr.rel (0) target = $region41
    $region40: #{tpu_custom_call.1} parent=1 // pred_region
      %2223 = dma.done [#allocation3], 256
    $region41: #{tpu_custom_call.1} parent=1 // pred_fallthru
      _
    %2224 = vsyncpa [#allocation3], 1

</llo_original>
